<compile_context>
chip_gen: v7x
topology: tpu7x:2x2x1
jax: 0.10.0
libtpu: 0.0.40
codegen_flags: <defaults>
</compile_context>

<pallas_src>
import functools

import jax
import jax.numpy as jnp
import numpy as np
from jax.experimental import pallas as pl
from jax.experimental.pallas import tpu as pltpu


# ---------------------------------------------------------------------------
# Pallas kernel
# ---------------------------------------------------------------------------
def _layernorm(y, g, b, eps=1e-5):
    mu = jnp.mean(y, axis=-1, keepdims=True)
    var = jnp.mean((y - mu) ** 2, axis=-1, keepdims=True)
    return (y - mu) * jax.lax.rsqrt(var + eps) * g + b


def decoder_layer_kernel(
    x_ref, mas_ref, mast_ref,
    wq_ref, wk_ref, wv_ref, wo_ref,
    g1_ref, be1_ref,
    w1_ref, b1_ref, w2_ref, b2_ref,
    g2_ref, be2_ref,
    out_ref,
    k_sc, v_sc, y_sc,
    *, num_heads, dk, tq,
):
    qt = pl.program_id(1)
    scale = 1.0 / (dk ** 0.5)
    bf16 = jnp.bfloat16

    x2d = x_ref.at[0]      # (n, d) ref view: full sequence, resident across query tiles
    m2d = mas_ref.at[0]    # (n, 1) ref view: sequence mask
    mkt = mast_ref[0]      # (1, n) key mask on lanes

    # ---- K/V projection: once per batch element, cached in bf16 VMEM scratch. ----
    @pl.when(qt == 0)
    def _():
        xk = x2d[...].astype(bf16)
        mk = m2d[...]
        k = jnp.dot(xk, wk_ref[...], preferred_element_type=jnp.float32) * mk
        v = jnp.dot(xk, wv_ref[...], preferred_element_type=jnp.float32) * mk
        k_sc[...] = k.astype(bf16)
        v_sc[...] = v.astype(bf16)

    # ---- Query tile sliced out of the resident full-sequence block (no extra DMA). ----
    row0 = pl.multiple_of(qt * tq, tq)
    xq = x2d[pl.ds(row0, tq), :]        # (tq, d)  f32 (kept f32 for residual / LayerNorm)
    mq = m2d[pl.ds(row0, tq), :]        # (tq, 1)

    # Full-width Q projection (one fat MXU call); softmax scale + query mask folded in (f32).
    q = jnp.dot(xq.astype(bf16), wq_ref[...], preferred_element_type=jnp.float32)
    q = (q * (mq * scale)).astype(bf16)                                  # (tq, d)

    # Head-invariant additive mask bias, computed once per query tile (not per head).
    bias = (1.0 - mq * mkt) * (-10000.0 * scale)                         # (tq, n)

    # ---- Per-head attention; each head's output lands in its lane slice of y_sc. ----
    # num_heads is small & static -> static python loop with static lane slices.
    for h in range(num_heads):
        lo = h * dk
        q_h = q[:, lo:lo + dk]                                           # (tq, dk) bf16
        k_h = k_sc[:, lo:lo + dk]                                        # (n,  dk) bf16
        v_h = v_sc[:, lo:lo + dk]                                        # (n,  dk) bf16
        s = jax.lax.dot_general(q_h, k_h, (((1,), (1,)), ((), ())),
                                preferred_element_type=jnp.float32)      # (tq, n)
        s = s + bias
        s_max = jnp.max(s, axis=-1, keepdims=True)
        e = jnp.exp(s - s_max)
        l = jnp.sum(e, axis=-1, keepdims=True)
        inv = pl.reciprocal(l, approx=True)
        inv = inv * (2.0 - l * inv)       # one Newton step ~= exact f32 divide
        # Masked key columns are already exactly 0 after the -1e4 bias (and V rows are 0),
        # so no (tq,n) pairwise mask multiply is needed here.
        p = (e * inv).astype(bf16)                                       # (tq, n)
        y_h = jnp.dot(p, v_h, preferred_element_type=jnp.float32)        # (tq, dk)
        y_sc[:, lo:lo + dk] = y_h.astype(bf16)

    # One fat (tq,d)@(d,d) WO matmul instead of h thin dk-wide contractions.
    attn = jnp.dot(y_sc[...], wo_ref[...], preferred_element_type=jnp.float32) * mq

    # ---- Residual + LN1 + FFN + LN2 epilogue on the resident (tq, d) tile. ----
    x1 = _layernorm(xq + attn, g1_ref[...], be1_ref[...]) * mq
    hid = jnp.maximum(
        jnp.dot(x1.astype(bf16), w1_ref[...], preferred_element_type=jnp.float32)
        + b1_ref[...], 0.0)
    f = (jnp.dot(hid.astype(bf16), w2_ref[...], preferred_element_type=jnp.float32)
         + b2_ref[...]) * mq
    out_ref[0] = _layernorm(x1 + f, g2_ref[...], be2_ref[...]) * mq


# ---------------------------------------------------------------------------
# Wrapper
# ---------------------------------------------------------------------------
def _nbytes(shape, dtype):
    return int(np.prod(shape)) * int(np.dtype(dtype).itemsize)


def decoder_layer_pallas(x, seq_mas, params, *, num_heads, q_tile=256):
    bs, n, d = x.shape
    d_hid = params["w1"].shape[1]
    assert d % num_heads == 0
    dk = d // num_heads

    # Query tile: 256 by default (multiple of 8); for small demos it clamps to n.
    tq = min(int(q_tile), n)
    assert n % tq == 0 and (tq == n or tq % 8 == 0), "q_tile must divide n (multiple of 8)"
    n_qt = n // tq

    f32, bf16 = jnp.float32, jnp.bfloat16
    x = x.astype(f32)
    seq_mas = seq_mas.astype(f32)
    seq_mas_t = jnp.transpose(seq_mas, (0, 2, 1))            # (bs, 1, n)

    # MXU operands shipped in bf16 (halves weight DMA + VMEM); LN/bias params stay f32.
    wq = params["wq"].astype(bf16)
    wk = params["wk"].astype(bf16)
    wv = params["wv"].astype(bf16)
    wo = params["wo"].astype(bf16)
    w1 = params["w1"].astype(bf16)
    w2 = params["w2"].astype(bf16)
    g1 = params["ln1_g"].reshape(1, d).astype(f32)
    be1 = params["ln1_b"].reshape(1, d).astype(f32)
    b1 = params["b1"].reshape(1, d_hid).astype(f32)
    b2 = params["b2"].reshape(1, d).astype(f32)
    g2 = params["ln2_g"].reshape(1, d).astype(f32)
    be2 = params["ln2_b"].reshape(1, d).astype(f32)

    rep2 = lambda b, qt: (0, 0)          # replicated 2-D params (weights / LN params)
    full_seq = lambda b, qt: (b, 0, 0)   # per-batch full-sequence blocks

    kernel = functools.partial(decoder_layer_kernel,
                               num_heads=num_heads, dk=dk, tq=tq)

    # Scoped-VMEM budget: double-buffered blocks + scratch + slack, capped at ~75% of
    # physical VMEM (~48 MiB on v7x's 64 MiB, ~96 MiB on v5e/v6e's 128 MiB).
    block_bytes = (
        _nbytes((1, n, d), f32) + _nbytes((1, n, 1), f32) + _nbytes((1, 1, n), f32)
        + 4 * _nbytes((d, d), bf16)
        + _nbytes((d, d_hid), bf16) + _nbytes((d_hid, d), bf16)
        + _nbytes((1, d_hid), f32) + 5 * _nbytes((1, d), f32)
        + _nbytes((1, tq, d), f32)
    )
    scratch_bytes = 2 * _nbytes((n, d), bf16) + _nbytes((tq, d), bf16)
    want = 2 * block_bytes + scratch_bytes + (8 << 20)
    try:
        phys = int(pltpu.get_tpu_info().vmem_capacity_bytes)
    except Exception:
        phys = 64 << 20                   # conservative (v7x-sized) fallback
    vmem_limit = int(min(max(want, 32 << 20), int(phys * 0.75)))

    return pl.pallas_call(
        kernel,
        out_shape=jax.ShapeDtypeStruct((bs, n, d), f32),
        grid=(bs, n_qt),
        in_specs=[
            pl.BlockSpec((1, n, d), full_seq),    # x (full sequence; query tile sliced in-kernel)
            pl.BlockSpec((1, n, 1), full_seq),    # seq_mas (keys; query tile sliced in-kernel)
            pl.BlockSpec((1, 1, n), full_seq),    # seq_mas^T (keys on lanes)
            pl.BlockSpec((d, d), rep2),           # WQ
            pl.BlockSpec((d, d), rep2),           # WK
            pl.BlockSpec((d, d), rep2),           # WV
            pl.BlockSpec((d, d), rep2),           # WO
            pl.BlockSpec((1, d), rep2),           # LN1 gamma
            pl.BlockSpec((1, d), rep2),           # LN1 beta
            pl.BlockSpec((d, d_hid), rep2),       # FFN W1
            pl.BlockSpec((1, d_hid), rep2),       # FFN b1
            pl.BlockSpec((d_hid, d), rep2),       # FFN W2
            pl.BlockSpec((1, d), rep2),           # FFN b2
            pl.BlockSpec((1, d), rep2),           # LN2 gamma
            pl.BlockSpec((1, d), rep2),           # LN2 beta
        ],
        out_specs=pl.BlockSpec((1, tq, d), lambda b, qt: (b, qt, 0)),
        scratch_shapes=[
            pltpu.VMEM((n, d), bf16),             # cached K (all heads)
            pltpu.VMEM((n, d), bf16),             # cached V (all heads)
            pltpu.VMEM((tq, d), bf16),            # concatenated per-head attention output
        ],
        compiler_params=pltpu.CompilerParams(
            dimension_semantics=("parallel", "arbitrary"),
            vmem_limit_bytes=vmem_limit,
        ),
    )(x, seq_mas, seq_mas_t, wq, wk, wv, wo,
      g1, be1, w1, b1, w2, b2, g2, be2)


# ---------------------------------------------------------------------------
# Pure-JAX reference (mirrors the PyTorch forward exactly, eval mode, f32)
# ---------------------------------------------------------------------------
def decoder_layer_ref(x, seq_mas, params, *, num_heads):
    bs, n, d = x.shape
    dk = d // num_heads
    m = seq_mas                                   # (bs, n, 1)

    q = (x @ params["wq"]) * m
    k = (x @ params["wk"]) * m
    v = (x @ params["wv"]) * m

    qh = q.reshape(bs, n, num_heads, dk).transpose(0, 2, 1, 3)
    kh = k.reshape(bs, n, num_heads, dk).transpose(0, 2, 1, 3)
    vh = v.reshape(bs, n, num_heads, dk).transpose(0, 2, 1, 3)

    s = jnp.einsum("bhqd,bhkd->bhqk", qh, kh)
    m4 = m[:, None, :, :]                         # (bs,1,n,1)
    m2 = m4 * m4.transpose(0, 1, 3, 2)            # (bs,1,n,n)
    s = s + (1.0 - m2) * (-10000.0)
    p = jax.nn.softmax(s / jnp.sqrt(jnp.float32(dk)), axis=-1) * m2
    y = jnp.einsum("bhqk,bhkd->bhqd", p, vh) * m4
    y = y.transpose(0, 2, 1, 3).reshape(bs, n, d)
    y = (y @ params["wo"]) * m

    def ln(z, g, b, eps=1e-5):
        mu = jnp.mean(z, axis=-1, keepdims=True)
        var = jnp.mean((z - mu) ** 2, axis=-1, keepdims=True)
        return (z - mu) / jnp.sqrt(var + eps) * g + b

    x1 = ln(x + y, params["ln1_g"], params["ln1_b"]) * m
    hid = jnp.maximum(x1 @ params["w1"] + params["b1"], 0.0)
    f = (hid @ params["w2"] + params["b2"]) * m
    x2 = ln(x1 + f, params["ln2_g"], params["ln2_b"]) * m
    return x2


# ---------------------------------------------------------------------------
# Main
# ---------------------------------------------------------------------------
if __name__ == "__main__":
    bs, n, d_model, d_hid, h = 2, 8, 32, 32, 4

    key = jax.random.PRNGKey(0)
    keys = jax.random.split(key, 16)

    scale = 0.1
    params = {
        "wq": scale * jax.random.normal(keys[0], (d_model, d_model), jnp.float32),
        "wk": scale * jax.random.normal(keys[1], (d_model, d_model), jnp.float32),
        "wv": scale * jax.random.normal(keys[2], (d_model, d_model), jnp.float32),
        "wo": scale * jax.random.normal(keys[3], (d_model, d_model), jnp.float32),
        "ln1_g": 1.0 + 0.1 * jax.random.normal(keys[4], (d_model,), jnp.float32),
        "ln1_b": 0.1 * jax.random.normal(keys[5], (d_model,), jnp.float32),
        "w1": scale * jax.random.normal(keys[6], (d_model, d_hid), jnp.float32),
        "b1": 0.1 * jax.random.normal(keys[7], (d_hid,), jnp.float32),
        "w2": scale * jax.random.normal(keys[8], (d_hid, d_model), jnp.float32),
        "b2": 0.1 * jax.random.normal(keys[9], (d_model,), jnp.float32),
        "ln2_g": 1.0 + 0.1 * jax.random.normal(keys[10], (d_model,), jnp.float32),
        "ln2_b": 0.1 * jax.random.normal(keys[11], (d_model,), jnp.float32),
    }

    x = jax.random.normal(keys[12], (bs, n, d_model), jnp.float32)

    # padding-style sequence mask: batch 0 fully valid, batch 1 has 5 valid tokens
    lengths = jnp.array([8, 5], dtype=jnp.int32)
    seq_mas = (jnp.arange(n)[None, :] < lengths[:, None]).astype(jnp.float32)
    seq_mas = seq_mas[:, :, None]  # (bs, n, 1)

    out = decoder_layer_pallas(x, seq_mas, params, num_heads=h)
    out = jax.block_until_ready(out)

    ref = decoder_layer_ref(x, seq_mas, params, num_heads=h)
    # Tolerance accommodates bf16 MXU operands (f32 accumulation) and the EUP
    # approximate-reciprocal (Newton-refined) softmax divide vs the f32 reference.
    np.testing.assert_allclose(np.asarray(out), np.asarray(ref),
                               rtol=2e-2, atol=2e-2)

    print("KERNEL_OK")
</pallas_src>

<mosaic_0001>
module attributes {stable_mosaic.version = 11 : i64} {
  func.func @decoder_layer_kernel(%arg0: i32, %arg1: i32, %arg2: memref<1x8x32xf32, #tpu.memory_space<vmem>>, %arg3: memref<1x8x1xf32, #tpu.memory_space<vmem>>, %arg4: memref<1x1x8xf32, #tpu.memory_space<vmem>>, %arg5: memref<32x32xbf16, #tpu.memory_space<vmem>>, %arg6: memref<32x32xbf16, #tpu.memory_space<vmem>>, %arg7: memref<32x32xbf16, #tpu.memory_space<vmem>>, %arg8: memref<32x32xbf16, #tpu.memory_space<vmem>>, %arg9: memref<1x32xf32, #tpu.memory_space<vmem>>, %arg10: memref<1x32xf32, #tpu.memory_space<vmem>>, %arg11: memref<32x32xbf16, #tpu.memory_space<vmem>>, %arg12: memref<1x32xf32, #tpu.memory_space<vmem>>, %arg13: memref<32x32xbf16, #tpu.memory_space<vmem>>, %arg14: memref<1x32xf32, #tpu.memory_space<vmem>>, %arg15: memref<1x32xf32, #tpu.memory_space<vmem>>, %arg16: memref<1x32xf32, #tpu.memory_space<vmem>>, %arg17: memref<1x8x32xf32, #tpu.memory_space<vmem>>, %arg18: memref<8x32xbf16, #tpu.memory_space<vmem>>, %arg19: memref<8x32xbf16, #tpu.memory_space<vmem>>, %arg20: memref<8x32xbf16, #tpu.memory_space<vmem>>) attributes {dimension_semantics = [#tpu.dimension_semantics<parallel>, #tpu.dimension_semantics<arbitrary>], iteration_bounds = array<i64: 2, 1>, scalar_prefetch = 0 : i64, scratch_operands = 3 : i64, tpu.core_type = #tpu.core_type<tc>, window_params = [{transform_indices = @transform_0, window_bounds = array<i64: 1, 8, 32>}, {transform_indices = @transform_1, window_bounds = array<i64: 1, 8, 1>}, {transform_indices = @transform_2, window_bounds = array<i64: 1, 1, 8>}, {pipeline_mode = #tpu.pipeline_mode<synchronous>, transform_indices = @transform_3, window_bounds = array<i64: 32, 32>}, {pipeline_mode = #tpu.pipeline_mode<synchronous>, transform_indices = @transform_4, window_bounds = array<i64: 32, 32>}, {pipeline_mode = #tpu.pipeline_mode<synchronous>, transform_indices = @transform_5, window_bounds = array<i64: 32, 32>}, {pipeline_mode = #tpu.pipeline_mode<synchronous>, transform_indices = @transform_6, window_bounds = array<i64: 32, 32>}, {pipeline_mode = #tpu.pipeline_mode<synchronous>, transform_indices = @transform_7, window_bounds = array<i64: 1, 32>}, {pipeline_mode = #tpu.pipeline_mode<synchronous>, transform_indices = @transform_8, window_bounds = array<i64: 1, 32>}, {pipeline_mode = #tpu.pipeline_mode<synchronous>, transform_indices = @transform_9, window_bounds = array<i64: 32, 32>}, {pipeline_mode = #tpu.pipeline_mode<synchronous>, transform_indices = @transform_10, window_bounds = array<i64: 1, 32>}, {pipeline_mode = #tpu.pipeline_mode<synchronous>, transform_indices = @transform_11, window_bounds = array<i64: 32, 32>}, {pipeline_mode = #tpu.pipeline_mode<synchronous>, transform_indices = @transform_12, window_bounds = array<i64: 1, 32>}, {pipeline_mode = #tpu.pipeline_mode<synchronous>, transform_indices = @transform_13, window_bounds = array<i64: 1, 32>}, {pipeline_mode = #tpu.pipeline_mode<synchronous>, transform_indices = @transform_14, window_bounds = array<i64: 1, 32>}, {transform_indices = @transform_15, window_bounds = array<i64: 1, 8, 32>}]} {
    %c0 = arith.constant 0 : index
    %c0_0 = arith.constant 0 : index
    %c0_1 = arith.constant 0 : index
    %0 = vector.load %arg4[%c0, %c0_0, %c0_1] : memref<1x1x8xf32, #tpu.memory_space<vmem>>, vector<1x1x8xf32>
    %1 = vector.shape_cast %0 : vector<1x1x8xf32> to vector<1x8xf32>
    %c0_i32 = arith.constant 0 : i32
    %2 = arith.cmpi eq, %arg1, %c0_i32 : i32
    %3 = arith.extui %2 : i1 to i32
    %c0_i32_2 = arith.constant 0 : i32
    %c0_i32_3 = arith.constant 0 : i32
    %c0_i32_4 = arith.constant 0 : i32
    %4 = arith.cmpi ne, %3, %c0_i32_4 : i32
    scf.if %4 {
      %200 = arith.index_cast %c0_i32_2 : i32 to index
      %c0_96 = arith.constant 0 : index
      %c0_97 = arith.constant 0 : index
      %201 = vector.load %arg2[%200, %c0_96, %c0_97] : memref<1x8x32xf32, #tpu.memory_space<vmem>>, vector<1x8x32xf32>
      %202 = vector.shape_cast %201 : vector<1x8x32xf32> to vector<8x32xf32>
      %203 = arith.truncf %202 : vector<8x32xf32> to vector<8x32xbf16>
      %204 = arith.index_cast %c0_i32_3 : i32 to index
      %c0_98 = arith.constant 0 : index
      %c0_99 = arith.constant 0 : index
      %205 = vector.load %arg3[%204, %c0_98, %c0_99] : memref<1x8x1xf32, #tpu.memory_space<vmem>>, vector<1x8x1xf32>
      %206 = vector.shape_cast %205 : vector<1x8x1xf32> to vector<8x1xf32>
      %c0_100 = arith.constant 0 : index
      %c0_101 = arith.constant 0 : index
      %207 = vector.load %arg6[%c0_100, %c0_101] : memref<32x32xbf16, #tpu.memory_space<vmem>>, vector<32x32xbf16>
      %cst_102 = arith.constant dense<0.000000e+00> : vector<8x32xf32>
      %208 = tpu.matmul %203, %207, %cst_102 {dimension_numbers = #tpu.dot_dimension_numbers<[1], [0], [0], [1], [0, 0, 1, 1], [], []>} : vector<8x32xbf16>, vector<32x32xbf16>, vector<8x32xf32> -> vector<8x32xf32>
      %209 = vector.broadcast %206 : vector<8x1xf32> to vector<8x32xf32>
      %210 = arith.mulf %208, %209 : vector<8x32xf32>
      %c0_103 = arith.constant 0 : index
      %c0_104 = arith.constant 0 : index
      %211 = vector.load %arg7[%c0_103, %c0_104] : memref<32x32xbf16, #tpu.memory_space<vmem>>, vector<32x32xbf16>
      %cst_105 = arith.constant dense<0.000000e+00> : vector<8x32xf32>
      %212 = tpu.matmul %203, %211, %cst_105 {dimension_numbers = #tpu.dot_dimension_numbers<[1], [0], [0], [1], [0, 0, 1, 1], [], []>} : vector<8x32xbf16>, vector<32x32xbf16>, vector<8x32xf32> -> vector<8x32xf32>
      %213 = vector.broadcast %206 : vector<8x1xf32> to vector<8x32xf32>
      %214 = arith.mulf %212, %213 : vector<8x32xf32>
      %215 = arith.truncf %210 : vector<8x32xf32> to vector<8x32xbf16>
      %c0_106 = arith.constant 0 : index
      %c0_107 = arith.constant 0 : index
      %216 = vector.load %arg18[%c0_106, %c0_107] : memref<8x32xbf16, #tpu.memory_space<vmem>>, vector<8x32xbf16>
      tpu.vector_store %arg18[%c0_106, %c0_107], %215 {strides = array<i32>} : memref<8x32xbf16, #tpu.memory_space<vmem>>, vector<8x32xbf16>,
      %217 = arith.truncf %214 : vector<8x32xf32> to vector<8x32xbf16>
      %c0_108 = arith.constant 0 : index
      %c0_109 = arith.constant 0 : index
      %218 = vector.load %arg19[%c0_108, %c0_109] : memref<8x32xbf16, #tpu.memory_space<vmem>>, vector<8x32xbf16>
      tpu.vector_store %arg19[%c0_108, %c0_109], %217 {strides = array<i32>} : memref<8x32xbf16, #tpu.memory_space<vmem>>, vector<8x32xbf16>,
    } else {
    }
    %c8_i32 = arith.constant 8 : i32
    %5 = arith.muli %arg1, %c8_i32 : i32
    %6 = tpu.assume_multiple %5, 8 : i32
    %c0_i32_5 = arith.constant 0 : i32
    %c0_i32_6 = arith.constant 0 : i32
    %c0_i32_7 = arith.constant 0 : i32
    %7 = tpu.memref_slice %arg2[%c0_i32_5, %c0_i32_6, %c0_i32_7] : memref<1x8x32xf32, #tpu.memory_space<vmem>> -> memref<1x8x32xf32, #tpu.memory_space<vmem>>
    %8 = tpu.memref_squeeze %7 : memref<1x8x32xf32, #tpu.memory_space<vmem>> -> memref<8x32xf32, #tpu.memory_space<vmem>>
    %9 = arith.index_cast %6 : i32 to index
    %c0_8 = arith.constant 0 : index
    %10 = vector.load %8[%9, %c0_8] : memref<8x32xf32, #tpu.memory_space<vmem>>, vector<8x32xf32>
    %c0_i32_9 = arith.constant 0 : i32
    %c0_i32_10 = arith.constant 0 : i32
    %c0_i32_11 = arith.constant 0 : i32
    %11 = tpu.memref_slice %arg3[%c0_i32_9, %c0_i32_10, %c0_i32_11] : memref<1x8x1xf32, #tpu.memory_space<vmem>> -> memref<1x8x1xf32, #tpu.memory_space<vmem>>
    %12 = tpu.memref_squeeze %11 : memref<1x8x1xf32, #tpu.memory_space<vmem>> -> memref<8x1xf32, #tpu.memory_space<vmem>>
    %13 = arith.index_cast %6 : i32 to index
    %c0_12 = arith.constant 0 : index
    %14 = vector.load %12[%13, %c0_12] : memref<8x1xf32, #tpu.memory_space<vmem>>, vector<8x1xf32>
    %15 = arith.truncf %10 : vector<8x32xf32> to vector<8x32xbf16>
    %c0_13 = arith.constant 0 : index
    %c0_14 = arith.constant 0 : index
    %16 = vector.load %arg5[%c0_13, %c0_14] : memref<32x32xbf16, #tpu.memory_space<vmem>>, vector<32x32xbf16>
    %cst = arith.constant dense<0.000000e+00> : vector<8x32xf32>
    %17 = tpu.matmul %15, %16, %cst {dimension_numbers = #tpu.dot_dimension_numbers<[1], [0], [0], [1], [0, 0, 1, 1], [], []>} : vector<8x32xbf16>, vector<32x32xbf16>, vector<8x32xf32> -> vector<8x32xf32>
    %cst_15 = arith.constant 0.353553385 : f32
    %18 = vector.broadcast %cst_15 : f32 to vector<8x1xf32>
    %19 = arith.mulf %14, %18 : vector<8x1xf32>
    %20 = vector.broadcast %19 : vector<8x1xf32> to vector<8x32xf32>
    %21 = arith.mulf %17, %20 : vector<8x32xf32>
    %22 = arith.truncf %21 : vector<8x32xf32> to vector<8x32xbf16>
    %23 = vector.broadcast %14 : vector<8x1xf32> to vector<8x8xf32>
    %24 = vector.broadcast %1 : vector<1x8xf32> to vector<8x8xf32>
    %25 = arith.mulf %23, %24 : vector<8x8xf32>
    %cst_16 = arith.constant 1.000000e+00 : f32
    %26 = vector.broadcast %cst_16 : f32 to vector<8x8xf32>
    %27 = arith.subf %26, %25 : vector<8x8xf32>
    %cst_17 = arith.constant -3535.53394 : f32
    %28 = vector.broadcast %cst_17 : f32 to vector<8x8xf32>
    %29 = arith.mulf %27, %28 : vector<8x8xf32>
    %30 = vector.extract_strided_slice %22 {offsets = [0, 0], sizes = [8, 8], strides = [1, 1]} : vector<8x32xbf16> to vector<8x8xbf16>
    %c0_18 = arith.constant 0 : index
    %c0_19 = arith.constant 0 : index
    %31 = vector.load %arg18[%c0_18, %c0_19] : memref<8x32xbf16, #tpu.memory_space<vmem>>, vector<8x8xbf16>
    %c0_20 = arith.constant 0 : index
    %c0_21 = arith.constant 0 : index
    %32 = vector.load %arg19[%c0_20, %c0_21] : memref<8x32xbf16, #tpu.memory_space<vmem>>, vector<8x8xbf16>
    %cst_22 = arith.constant dense<0.000000e+00> : vector<8x8xf32>
    %33 = tpu.matmul %30, %31, %cst_22 {dimension_numbers = #tpu.dot_dimension_numbers<[1], [1], [0], [0], [0, 0, 1, 0], [], []>} : vector<8x8xbf16>, vector<8x8xbf16>, vector<8x8xf32> -> vector<8x8xf32>
    %34 = arith.addf %33, %29 : vector<8x8xf32>
    %cst_23 = arith.constant dense<0xFF800000> : vector<8xf32>
    %35 = vector.multi_reduction <maximumf>, %34, %cst_23 [1] : vector<8x8xf32> to vector<8xf32>
    %36 = vector.shape_cast %35 : vector<8xf32> to vector<8x1xf32>
    %37 = vector.broadcast %36 : vector<8x1xf32> to vector<8x8xf32>
    %38 = arith.subf %34, %37 : vector<8x8xf32>
    %39 = math.exp %38 : vector<8x8xf32>
    %cst_24 = arith.constant dense<0.000000e+00> : vector<8xf32>
    %40 = vector.multi_reduction <add>, %39, %cst_24 [1] : vector<8x8xf32> to vector<8xf32>
    %41 = vector.shape_cast %40 : vector<8xf32> to vector<8x1xf32>
    %42 = tpu.reciprocal %41 {approx = true} : vector<8x1xf32> -> vector<8x1xf32>
    %43 = arith.mulf %41, %42 : vector<8x1xf32>
    %cst_25 = arith.constant 2.000000e+00 : f32
    %44 = vector.broadcast %cst_25 : f32 to vector<8x1xf32>
    %45 = arith.subf %44, %43 : vector<8x1xf32>
    %46 = arith.mulf %42, %45 : vector<8x1xf32>
    %47 = vector.broadcast %46 : vector<8x1xf32> to vector<8x8xf32>
    %48 = arith.mulf %39, %47 : vector<8x8xf32>
    %49 = arith.truncf %48 : vector<8x8xf32> to vector<8x8xbf16>
    %cst_26 = arith.constant dense<0.000000e+00> : vector<8x8xf32>
    %50 = tpu.matmul %49, %32, %cst_26 {dimension_numbers = #tpu.dot_dimension_numbers<[1], [0], [0], [1], [0, 0, 1, 1], [], []>} : vector<8x8xbf16>, vector<8x8xbf16>, vector<8x8xf32> -> vector<8x8xf32>
    %51 = arith.truncf %50 : vector<8x8xf32> to vector<8x8xbf16>
    %c0_27 = arith.constant 0 : index
    %c0_28 = arith.constant 0 : index
    %52 = vector.load %arg20[%c0_27, %c0_28] : memref<8x32xbf16, #tpu.memory_space<vmem>>, vector<8x8xbf16>
    tpu.vector_store %arg20[%c0_27, %c0_28], %51 {strides = array<i32>} : memref<8x32xbf16, #tpu.memory_space<vmem>>, vector<8x8xbf16>,
    %53 = vector.extract_strided_slice %22 {offsets = [0, 8], sizes = [8, 8], strides = [1, 1]} : vector<8x32xbf16> to vector<8x8xbf16>
    %c0_29 = arith.constant 0 : index
    %c8 = arith.constant 8 : index
    %54 = vector.load %arg18[%c0_29, %c8] : memref<8x32xbf16, #tpu.memory_space<vmem>>, vector<8x8xbf16>
    %c0_30 = arith.constant 0 : index
    %c8_31 = arith.constant 8 : index
    %55 = vector.load %arg19[%c0_30, %c8_31] : memref<8x32xbf16, #tpu.memory_space<vmem>>, vector<8x8xbf16>
    %cst_32 = arith.constant dense<0.000000e+00> : vector<8x8xf32>
    %56 = tpu.matmul %53, %54, %cst_32 {dimension_numbers = #tpu.dot_dimension_numbers<[1], [1], [0], [0], [0, 0, 1, 0], [], []>} : vector<8x8xbf16>, vector<8x8xbf16>, vector<8x8xf32> -> vector<8x8xf32>
    %57 = arith.addf %56, %29 : vector<8x8xf32>
    %cst_33 = arith.constant dense<0xFF800000> : vector<8xf32>
    %58 = vector.multi_reduction <maximumf>, %57, %cst_33 [1] : vector<8x8xf32> to vector<8xf32>
    %59 = vector.shape_cast %58 : vector<8xf32> to vector<8x1xf32>
    %60 = vector.broadcast %59 : vector<8x1xf32> to vector<8x8xf32>
    %61 = arith.subf %57, %60 : vector<8x8xf32>
    %62 = math.exp %61 : vector<8x8xf32>
    %cst_34 = arith.constant dense<0.000000e+00> : vector<8xf32>
    %63 = vector.multi_reduction <add>, %62, %cst_34 [1] : vector<8x8xf32> to vector<8xf32>
    %64 = vector.shape_cast %63 : vector<8xf32> to vector<8x1xf32>
    %65 = tpu.reciprocal %64 {approx = true} : vector<8x1xf32> -> vector<8x1xf32>
    %66 = arith.mulf %64, %65 : vector<8x1xf32>
    %cst_35 = arith.constant 2.000000e+00 : f32
    %67 = vector.broadcast %cst_35 : f32 to vector<8x1xf32>
    %68 = arith.subf %67, %66 : vector<8x1xf32>
    %69 = arith.mulf %65, %68 : vector<8x1xf32>
    %70 = vector.broadcast %69 : vector<8x1xf32> to vector<8x8xf32>
    %71 = arith.mulf %62, %70 : vector<8x8xf32>
    %72 = arith.truncf %71 : vector<8x8xf32> to vector<8x8xbf16>
    %cst_36 = arith.constant dense<0.000000e+00> : vector<8x8xf32>
    %73 = tpu.matmul %72, %55, %cst_36 {dimension_numbers = #tpu.dot_dimension_numbers<[1], [0], [0], [1], [0, 0, 1, 1], [], []>} : vector<8x8xbf16>, vector<8x8xbf16>, vector<8x8xf32> -> vector<8x8xf32>
    %74 = arith.truncf %73 : vector<8x8xf32> to vector<8x8xbf16>
    %c0_37 = arith.constant 0 : index
    %c8_38 = arith.constant 8 : index
    %75 = vector.load %arg20[%c0_37, %c8_38] : memref<8x32xbf16, #tpu.memory_space<vmem>>, vector<8x8xbf16>
    tpu.vector_store %arg20[%c0_37, %c8_38], %74 {strides = array<i32>} : memref<8x32xbf16, #tpu.memory_space<vmem>>, vector<8x8xbf16>,
    %76 = vector.extract_strided_slice %22 {offsets = [0, 16], sizes = [8, 8], strides = [1, 1]} : vector<8x32xbf16> to vector<8x8xbf16>
    %c0_39 = arith.constant 0 : index
    %c16 = arith.constant 16 : index
    %77 = vector.load %arg18[%c0_39, %c16] : memref<8x32xbf16, #tpu.memory_space<vmem>>, vector<8x8xbf16>
    %c0_40 = arith.constant 0 : index
    %c16_41 = arith.constant 16 : index
    %78 = vector.load %arg19[%c0_40, %c16_41] : memref<8x32xbf16, #tpu.memory_space<vmem>>, vector<8x8xbf16>
    %cst_42 = arith.constant dense<0.000000e+00> : vector<8x8xf32>
    %79 = tpu.matmul %76, %77, %cst_42 {dimension_numbers = #tpu.dot_dimension_numbers<[1], [1], [0], [0], [0, 0, 1, 0], [], []>} : vector<8x8xbf16>, vector<8x8xbf16>, vector<8x8xf32> -> vector<8x8xf32>
    %80 = arith.addf %79, %29 : vector<8x8xf32>
    %cst_43 = arith.constant dense<0xFF800000> : vector<8xf32>
    %81 = vector.multi_reduction <maximumf>, %80, %cst_43 [1] : vector<8x8xf32> to vector<8xf32>
    %82 = vector.shape_cast %81 : vector<8xf32> to vector<8x1xf32>
    %83 = vector.broadcast %82 : vector<8x1xf32> to vector<8x8xf32>
    %84 = arith.subf %80, %83 : vector<8x8xf32>
    %85 = math.exp %84 : vector<8x8xf32>
    %cst_44 = arith.constant dense<0.000000e+00> : vector<8xf32>
    %86 = vector.multi_reduction <add>, %85, %cst_44 [1] : vector<8x8xf32> to vector<8xf32>
    %87 = vector.shape_cast %86 : vector<8xf32> to vector<8x1xf32>
    %88 = tpu.reciprocal %87 {approx = true} : vector<8x1xf32> -> vector<8x1xf32>
    %89 = arith.mulf %87, %88 : vector<8x1xf32>
    %cst_45 = arith.constant 2.000000e+00 : f32
    %90 = vector.broadcast %cst_45 : f32 to vector<8x1xf32>
    %91 = arith.subf %90, %89 : vector<8x1xf32>
    %92 = arith.mulf %88, %91 : vector<8x1xf32>
    %93 = vector.broadcast %92 : vector<8x1xf32> to vector<8x8xf32>
    %94 = arith.mulf %85, %93 : vector<8x8xf32>
    %95 = arith.truncf %94 : vector<8x8xf32> to vector<8x8xbf16>
    %cst_46 = arith.constant dense<0.000000e+00> : vector<8x8xf32>
    %96 = tpu.matmul %95, %78, %cst_46 {dimension_numbers = #tpu.dot_dimension_numbers<[1], [0], [0], [1], [0, 0, 1, 1], [], []>} : vector<8x8xbf16>, vector<8x8xbf16>, vector<8x8xf32> -> vector<8x8xf32>
    %97 = arith.truncf %96 : vector<8x8xf32> to vector<8x8xbf16>
    %c0_47 = arith.constant 0 : index
    %c16_48 = arith.constant 16 : index
    %98 = vector.load %arg20[%c0_47, %c16_48] : memref<8x32xbf16, #tpu.memory_space<vmem>>, vector<8x8xbf16>
    tpu.vector_store %arg20[%c0_47, %c16_48], %97 {strides = array<i32>} : memref<8x32xbf16, #tpu.memory_space<vmem>>, vector<8x8xbf16>,
    %99 = vector.extract_strided_slice %22 {offsets = [0, 24], sizes = [8, 8], strides = [1, 1]} : vector<8x32xbf16> to vector<8x8xbf16>
    %c0_49 = arith.constant 0 : index
    %c24 = arith.constant 24 : index
    %100 = vector.load %arg18[%c0_49, %c24] : memref<8x32xbf16, #tpu.memory_space<vmem>>, vector<8x8xbf16>
    %c0_50 = arith.constant 0 : index
    %c24_51 = arith.constant 24 : index
    %101 = vector.load %arg19[%c0_50, %c24_51] : memref<8x32xbf16, #tpu.memory_space<vmem>>, vector<8x8xbf16>
    %cst_52 = arith.constant dense<0.000000e+00> : vector<8x8xf32>
    %102 = tpu.matmul %99, %100, %cst_52 {dimension_numbers = #tpu.dot_dimension_numbers<[1], [1], [0], [0], [0, 0, 1, 0], [], []>} : vector<8x8xbf16>, vector<8x8xbf16>, vector<8x8xf32> -> vector<8x8xf32>
    %103 = arith.addf %102, %29 : vector<8x8xf32>
    %cst_53 = arith.constant dense<0xFF800000> : vector<8xf32>
    %104 = vector.multi_reduction <maximumf>, %103, %cst_53 [1] : vector<8x8xf32> to vector<8xf32>
    %105 = vector.shape_cast %104 : vector<8xf32> to vector<8x1xf32>
    %106 = vector.broadcast %105 : vector<8x1xf32> to vector<8x8xf32>
    %107 = arith.subf %103, %106 : vector<8x8xf32>
    %108 = math.exp %107 : vector<8x8xf32>
    %cst_54 = arith.constant dense<0.000000e+00> : vector<8xf32>
    %109 = vector.multi_reduction <add>, %108, %cst_54 [1] : vector<8x8xf32> to vector<8xf32>
    %110 = vector.shape_cast %109 : vector<8xf32> to vector<8x1xf32>
    %111 = tpu.reciprocal %110 {approx = true} : vector<8x1xf32> -> vector<8x1xf32>
    %112 = arith.mulf %110, %111 : vector<8x1xf32>
    %cst_55 = arith.constant 2.000000e+00 : f32
    %113 = vector.broadcast %cst_55 : f32 to vector<8x1xf32>
    %114 = arith.subf %113, %112 : vector<8x1xf32>
    %115 = arith.mulf %111, %114 : vector<8x1xf32>
    %116 = vector.broadcast %115 : vector<8x1xf32> to vector<8x8xf32>
    %117 = arith.mulf %108, %116 : vector<8x8xf32>
    %118 = arith.truncf %117 : vector<8x8xf32> to vector<8x8xbf16>
    %cst_56 = arith.constant dense<0.000000e+00> : vector<8x8xf32>
    %119 = tpu.matmul %118, %101, %cst_56 {dimension_numbers = #tpu.dot_dimension_numbers<[1], [0], [0], [1], [0, 0, 1, 1], [], []>} : vector<8x8xbf16>, vector<8x8xbf16>, vector<8x8xf32> -> vector<8x8xf32>
    %120 = arith.truncf %119 : vector<8x8xf32> to vector<8x8xbf16>
    %c0_57 = arith.constant 0 : index
    %c24_58 = arith.constant 24 : index
    %121 = vector.load %arg20[%c0_57, %c24_58] : memref<8x32xbf16, #tpu.memory_space<vmem>>, vector<8x8xbf16>
    tpu.vector_store %arg20[%c0_57, %c24_58], %120 {strides = array<i32>} : memref<8x32xbf16, #tpu.memory_space<vmem>>, vector<8x8xbf16>,
    %c0_59 = arith.constant 0 : index
    %c0_60 = arith.constant 0 : index
    %122 = vector.load %arg20[%c0_59, %c0_60] : memref<8x32xbf16, #tpu.memory_space<vmem>>, vector<8x32xbf16>
    %c0_61 = arith.constant 0 : index
    %c0_62 = arith.constant 0 : index
    %123 = vector.load %arg8[%c0_61, %c0_62] : memref<32x32xbf16, #tpu.memory_space<vmem>>, vector<32x32xbf16>
    %cst_63 = arith.constant dense<0.000000e+00> : vector<8x32xf32>
    %124 = tpu.matmul %122, %123, %cst_63 {dimension_numbers = #tpu.dot_dimension_numbers<[1], [0], [0], [1], [0, 0, 1, 1], [], []>} : vector<8x32xbf16>, vector<32x32xbf16>, vector<8x32xf32> -> vector<8x32xf32>
    %125 = vector.broadcast %14 : vector<8x1xf32> to vector<8x32xf32>
    %126 = arith.mulf %124, %125 : vector<8x32xf32>
    %127 = arith.addf %10, %126 : vector<8x32xf32>
    %c0_64 = arith.constant 0 : index
    %c0_65 = arith.constant 0 : index
    %128 = vector.load %arg9[%c0_64, %c0_65] : memref<1x32xf32, #tpu.memory_space<vmem>>, vector<1x32xf32>
    %c0_66 = arith.constant 0 : index
    %c0_67 = arith.constant 0 : index
    %129 = vector.load %arg10[%c0_66, %c0_67] : memref<1x32xf32, #tpu.memory_space<vmem>>, vector<1x32xf32>
    %cst_68 = arith.constant dense<0.000000e+00> : vector<8xf32>
    %130 = vector.multi_reduction <add>, %127, %cst_68 [1] : vector<8x32xf32> to vector<8xf32>
    %131 = vector.shape_cast %130 : vector<8xf32> to vector<8x1xf32>
    %cst_69 = arith.constant 3.200000e+01 : f32
    %132 = vector.broadcast %cst_69 : f32 to vector<8x1xf32>
    %133 = arith.divf %131, %132 : vector<8x1xf32>
    %134 = vector.broadcast %133 : vector<8x1xf32> to vector<8x32xf32>
    %135 = arith.subf %127, %134 : vector<8x32xf32>
    %136 = arith.mulf %135, %135 : vector<8x32xf32>
    %cst_70 = arith.constant dense<0.000000e+00> : vector<8xf32>
    %137 = vector.multi_reduction <add>, %136, %cst_70 [1] : vector<8x32xf32> to vector<8xf32>
    %138 = vector.shape_cast %137 : vector<8xf32> to vector<8x1xf32>
    %cst_71 = arith.constant 3.200000e+01 : f32
    %139 = vector.broadcast %cst_71 : f32 to vector<8x1xf32>
    %140 = arith.divf %138, %139 : vector<8x1xf32>
    %141 = vector.broadcast %133 : vector<8x1xf32> to vector<8x32xf32>
    %142 = arith.subf %127, %141 : vector<8x32xf32>
    %cst_72 = arith.constant 9.99999974E-6 : f32
    %143 = vector.broadcast %cst_72 : f32 to vector<8x1xf32>
    %144 = arith.addf %140, %143 : vector<8x1xf32>
    %145 = math.rsqrt %144 : vector<8x1xf32>
    %146 = vector.broadcast %145 : vector<8x1xf32> to vector<8x32xf32>
    %147 = arith.mulf %142, %146 : vector<8x32xf32>
    %148 = vector.broadcast %128 : vector<1x32xf32> to vector<8x32xf32>
    %149 = arith.mulf %147, %148 : vector<8x32xf32>
    %150 = vector.broadcast %129 : vector<1x32xf32> to vector<8x32xf32>
    %151 = arith.addf %149, %150 : vector<8x32xf32>
    %152 = vector.broadcast %14 : vector<8x1xf32> to vector<8x32xf32>
    %153 = arith.mulf %151, %152 : vector<8x32xf32>
    %154 = arith.truncf %153 : vector<8x32xf32> to vector<8x32xbf16>
    %c0_73 = arith.constant 0 : index
    %c0_74 = arith.constant 0 : index
    %155 = vector.load %arg11[%c0_73, %c0_74] : memref<32x32xbf16, #tpu.memory_space<vmem>>, vector<32x32xbf16>
    %cst_75 = arith.constant dense<0.000000e+00> : vector<8x32xf32>
    %156 = tpu.matmul %154, %155, %cst_75 {dimension_numbers = #tpu.dot_dimension_numbers<[1], [0], [0], [1], [0, 0, 1, 1], [], []>} : vector<8x32xbf16>, vector<32x32xbf16>, vector<8x32xf32> -> vector<8x32xf32>
    %c0_76 = arith.constant 0 : index
    %c0_77 = arith.constant 0 : index
    %157 = vector.load %arg12[%c0_76, %c0_77] : memref<1x32xf32, #tpu.memory_space<vmem>>, vector<1x32xf32>
    %158 = vector.broadcast %157 : vector<1x32xf32> to vector<8x32xf32>
    %159 = arith.addf %156, %158 : vector<8x32xf32>
    %cst_78 = arith.constant 0.000000e+00 : f32
    %160 = vector.broadcast %cst_78 : f32 to vector<8x32xf32>
    %161 = arith.maximumf %159, %160 : vector<8x32xf32>
    %162 = arith.truncf %161 : vector<8x32xf32> to vector<8x32xbf16>
    %c0_79 = arith.constant 0 : index
    %c0_80 = arith.constant 0 : index
    %163 = vector.load %arg13[%c0_79, %c0_80] : memref<32x32xbf16, #tpu.memory_space<vmem>>, vector<32x32xbf16>
    %cst_81 = arith.constant dense<0.000000e+00> : vector<8x32xf32>
    %164 = tpu.matmul %162, %163, %cst_81 {dimension_numbers = #tpu.dot_dimension_numbers<[1], [0], [0], [1], [0, 0, 1, 1], [], []>} : vector<8x32xbf16>, vector<32x32xbf16>, vector<8x32xf32> -> vector<8x32xf32>
    %c0_82 = arith.constant 0 : index
    %c0_83 = arith.constant 0 : index
    %165 = vector.load %arg14[%c0_82, %c0_83] : memref<1x32xf32, #tpu.memory_space<vmem>>, vector<1x32xf32>
    %166 = vector.broadcast %165 : vector<1x32xf32> to vector<8x32xf32>
    %167 = arith.addf %164, %166 : vector<8x32xf32>
    %168 = vector.broadcast %14 : vector<8x1xf32> to vector<8x32xf32>
    %169 = arith.mulf %167, %168 : vector<8x32xf32>
    %170 = arith.addf %153, %169 : vector<8x32xf32>
    %c0_84 = arith.constant 0 : index
    %c0_85 = arith.constant 0 : index
    %171 = vector.load %arg15[%c0_84, %c0_85] : memref<1x32xf32, #tpu.memory_space<vmem>>, vector<1x32xf32>
    %c0_86 = arith.constant 0 : index
    %c0_87 = arith.constant 0 : index
    %172 = vector.load %arg16[%c0_86, %c0_87] : memref<1x32xf32, #tpu.memory_space<vmem>>, vector<1x32xf32>
    %cst_88 = arith.constant dense<0.000000e+00> : vector<8xf32>
    %173 = vector.multi_reduction <add>, %170, %cst_88 [1] : vector<8x32xf32> to vector<8xf32>
    %174 = vector.shape_cast %173 : vector<8xf32> to vector<8x1xf32>
    %cst_89 = arith.constant 3.200000e+01 : f32
    %175 = vector.broadcast %cst_89 : f32 to vector<8x1xf32>
    %176 = arith.divf %174, %175 : vector<8x1xf32>
    %177 = vector.broadcast %176 : vector<8x1xf32> to vector<8x32xf32>
    %178 = arith.subf %170, %177 : vector<8x32xf32>
    %179 = arith.mulf %178, %178 : vector<8x32xf32>
    %cst_90 = arith.constant dense<0.000000e+00> : vector<8xf32>
    %180 = vector.multi_reduction <add>, %179, %cst_90 [1] : vector<8x32xf32> to vector<8xf32>
    %181 = vector.shape_cast %180 : vector<8xf32> to vector<8x1xf32>
    %cst_91 = arith.constant 3.200000e+01 : f32
    %182 = vector.broadcast %cst_91 : f32 to vector<8x1xf32>
    %183 = arith.divf %181, %182 : vector<8x1xf32>
    %184 = vector.broadcast %176 : vector<8x1xf32> to vector<8x32xf32>
    %185 = arith.subf %170, %184 : vector<8x32xf32>
    %cst_92 = arith.constant 9.99999974E-6 : f32
    %186 = vector.broadcast %cst_92 : f32 to vector<8x1xf32>
    %187 = arith.addf %183, %186 : vector<8x1xf32>
    %188 = math.rsqrt %187 : vector<8x1xf32>
    %189 = vector.broadcast %188 : vector<8x1xf32> to vector<8x32xf32>
    %190 = arith.mulf %185, %189 : vector<8x32xf32>
    %191 = vector.broadcast %171 : vector<1x32xf32> to vector<8x32xf32>
    %192 = arith.mulf %190, %191 : vector<8x32xf32>
    %193 = vector.broadcast %172 : vector<1x32xf32> to vector<8x32xf32>
    %194 = arith.addf %192, %193 : vector<8x32xf32>
    %195 = vector.broadcast %14 : vector<8x1xf32> to vector<8x32xf32>
    %196 = arith.mulf %194, %195 : vector<8x32xf32>
    %c0_93 = arith.constant 0 : index
    %c0_94 = arith.constant 0 : index
    %c0_95 = arith.constant 0 : index
    %197 = vector.load %arg17[%c0_93, %c0_94, %c0_95] : memref<1x8x32xf32, #tpu.memory_space<vmem>>, vector<1x8x32xf32>
    %198 = vector.shape_cast %197 : vector<1x8x32xf32> to vector<8x32xf32>
    %199 = vector.shape_cast %196 : vector<8x32xf32> to vector<1x8x32xf32>
    tpu.vector_store %arg17[%c0_93, %c0_94, %c0_95], %199 {strides = array<i32>} : memref<1x8x32xf32, #tpu.memory_space<vmem>>, vector<1x8x32xf32>,
    return
  }
  func.func @transform_0(%arg0: i32, %arg1: i32) -> (i32, i32, i32) {
    %c0_i32 = arith.constant 0 : i32
    %c0_i32_0 = arith.constant 0 : i32
    %c0_i32_1 = arith.constant 0 : i32
    return %arg0, %c0_i32, %c0_i32_0 : i32, i32, i32
  }
  func.func @transform_1(%arg0: i32, %arg1: i32) -> (i32, i32, i32) {
    %c0_i32 = arith.constant 0 : i32
    %c0_i32_0 = arith.constant 0 : i32
    %c0_i32_1 = arith.constant 0 : i32
    return %arg0, %c0_i32, %c0_i32_0 : i32, i32, i32
  }
  func.func @transform_2(%arg0: i32, %arg1: i32) -> (i32, i32, i32) {
    %c0_i32 = arith.constant 0 : i32
    %c0_i32_0 = arith.constant 0 : i32
    %c0_i32_1 = arith.constant 0 : i32
    return %arg0, %c0_i32, %c0_i32_0 : i32, i32, i32
  }
  func.func @transform_3(%arg0: i32, %arg1: i32) -> (i32, i32) {
    %c0_i32 = arith.constant 0 : i32
    %c0_i32_0 = arith.constant 0 : i32
    %c0_i32_1 = arith.constant 0 : i32
    return %c0_i32, %c0_i32_0 : i32, i32
  }
  func.func @transform_4(%arg0: i32, %arg1: i32) -> (i32, i32) {
    %c0_i32 = arith.constant 0 : i32
    %c0_i32_0 = arith.constant 0 : i32
    %c0_i32_1 = arith.constant 0 : i32
    return %c0_i32, %c0_i32_0 : i32, i32
  }
  func.func @transform_5(%arg0: i32, %arg1: i32) -> (i32, i32) {
    %c0_i32 = arith.constant 0 : i32
    %c0_i32_0 = arith.constant 0 : i32
    %c0_i32_1 = arith.constant 0 : i32
    return %c0_i32, %c0_i32_0 : i32, i32
  }
  func.func @transform_6(%arg0: i32, %arg1: i32) -> (i32, i32) {
    %c0_i32 = arith.constant 0 : i32
    %c0_i32_0 = arith.constant 0 : i32
    %c0_i32_1 = arith.constant 0 : i32
    return %c0_i32, %c0_i32_0 : i32, i32
  }
  func.func @transform_7(%arg0: i32, %arg1: i32) -> (i32, i32) {
    %c0_i32 = arith.constant 0 : i32
    %c0_i32_0 = arith.constant 0 : i32
    %c0_i32_1 = arith.constant 0 : i32
    return %c0_i32, %c0_i32_0 : i32, i32
  }
  func.func @transform_8(%arg0: i32, %arg1: i32) -> (i32, i32) {
    %c0_i32 = arith.constant 0 : i32
    %c0_i32_0 = arith.constant 0 : i32
    %c0_i32_1 = arith.constant 0 : i32
    return %c0_i32, %c0_i32_0 : i32, i32
  }
  func.func @transform_9(%arg0: i32, %arg1: i32) -> (i32, i32) {
    %c0_i32 = arith.constant 0 : i32
    %c0_i32_0 = arith.constant 0 : i32
    %c0_i32_1 = arith.constant 0 : i32
    return %c0_i32, %c0_i32_0 : i32, i32
  }
  func.func @transform_10(%arg0: i32, %arg1: i32) -> (i32, i32) {
    %c0_i32 = arith.constant 0 : i32
    %c0_i32_0 = arith.constant 0 : i32
    %c0_i32_1 = arith.constant 0 : i32
    return %c0_i32, %c0_i32_0 : i32, i32
  }
  func.func @transform_11(%arg0: i32, %arg1: i32) -> (i32, i32) {
    %c0_i32 = arith.constant 0 : i32
    %c0_i32_0 = arith.constant 0 : i32
    %c0_i32_1 = arith.constant 0 : i32
    return %c0_i32, %c0_i32_0 : i32, i32
  }
  func.func @transform_12(%arg0: i32, %arg1: i32) -> (i32, i32) {
    %c0_i32 = arith.constant 0 : i32
    %c0_i32_0 = arith.constant 0 : i32
    %c0_i32_1 = arith.constant 0 : i32
    return %c0_i32, %c0_i32_0 : i32, i32
  }
  func.func @transform_13(%arg0: i32, %arg1: i32) -> (i32, i32) {
    %c0_i32 = arith.constant 0 : i32
    %c0_i32_0 = arith.constant 0 : i32
    %c0_i32_1 = arith.constant 0 : i32
    return %c0_i32, %c0_i32_0 : i32, i32
  }
  func.func @transform_14(%arg0: i32, %arg1: i32) -> (i32, i32) {
    %c0_i32 = arith.constant 0 : i32
    %c0_i32_0 = arith.constant 0 : i32
    %c0_i32_1 = arith.constant 0 : i32
    return %c0_i32, %c0_i32_0 : i32, i32
  }
  func.func @transform_15(%arg0: i32, %arg1: i32) -> (i32, i32, i32) {
    %c0_i32 = arith.constant 0 : i32
    %c0_i32_0 = arith.constant 0 : i32
    return %arg0, %arg1, %c0_i32 : i32, i32, i32
  }
}

</mosaic_0001>

<llo_original>
// kernel: tpu_custom_call.1
$region0: #{tpu_custom_call.1}
  #allocation0 [shape = 'u32[]', space=smem, size = 0x4, offset = 0x4, fixed_abs, tag = 'smem constant byte address 0x4 - core index']
  #allocation1 [shape = 'u32[144,128]{1,0:T(1,128)}', space=vmem, size = 0x12000, scoped, tag = 'internal scratch']
  #allocation2 [shape = 'bf16[8,32]{1,0:T(8,128)(2,1)}', space=vmem, size = 0x800, scoped, tag = 'scratch operand']
  #allocation3 [shape = 'bf16[8,32]{1,0:T(8,128)(2,1)}', space=vmem, size = 0x800, scoped, tag = 'scratch operand']
  #allocation4 [shape = 'bf16[8,32]{1,0:T(8,128)(2,1)}', space=vmem, size = 0x800, scoped, tag = 'scratch operand']
  %s0 = inlined_call_operand.vmem [shape: f32[2,8,32], index: 0, kind: input, shape index: {}]
  %s1 = inlined_call_operand.vmem [shape: f32[2,8,1], index: 1, kind: input, shape index: {}]
  %s2 = inlined_call_operand.hbm [shape: f32[2,1,8], index: 2, kind: input, shape index: {}]
  %s3 = inlined_call_operand.hbm [shape: bf16[32,32], index: 3, kind: input, shape index: {}]
  %s4 = inlined_call_operand.vmem [shape: bf16[32,32], index: 4, kind: input, shape index: {}]
  %s5 = inlined_call_operand.hbm [shape: bf16[32,32], index: 5, kind: input, shape index: {}]
  %s6 = inlined_call_operand.hbm [shape: bf16[32,32], index: 6, kind: input, shape index: {}]
  %s7 = inlined_call_operand.hbm [shape: f32[1,32], index: 7, kind: input, shape index: {}]
  %s8 = inlined_call_operand.hbm [shape: f32[1,32], index: 8, kind: input, shape index: {}]
  %s9 = inlined_call_operand.vmem [shape: bf16[32,32], index: 9, kind: input, shape index: {}]
  %s10 = inlined_call_operand.vmem [shape: f32[1,32], index: 10, kind: input, shape index: {}]
  %s11 = inlined_call_operand.hbm [shape: bf16[32,32], index: 11, kind: input, shape index: {}]
  %s12 = inlined_call_operand.vmem [shape: f32[1,32], index: 12, kind: input, shape index: {}]
  %s13 = inlined_call_operand.vmem [shape: f32[1,32], index: 13, kind: input, shape index: {}]
  %s14 = inlined_call_operand.vmem [shape: f32[1,32], index: 14, kind: input, shape index: {}]
  %s15 = inlined_call_operand.hbm [shape: f32[2,8,32], index: 15, kind: output, shape index: {}]
  %s16 = sld [smem:[#allocation0]]
  $region125: #{tpu_custom_call.1} parent=0
    _
  %s18 = ssub.s32 1, %s16
  %s19 = scalar_select 0, %s18, %s16
  $region1: #{tpu_custom_call.1} parent=0
    #allocation5 [shape = 'u8[1024]{0}', space=vmem, size = 0x400, scoped, tag = 'input window, operand 2']
    #allocation6 [shape = 's32[2]{0}', space=sflag, size = 0x8, scoped, tag = 'scoped memory for tpu_custom_call.1']
    #allocation7 [shape = 's32[2]{0}', space=sflag, size = 0x8, scoped, tag = 'scoped memory for tpu_custom_call.1']
    #allocation8 [shape = 'u8[8192]{0}', space=vmem, size = 0x2000, scoped, tag = 'input window, operand 3, single buffered']
    #allocation9 [shape = 's32[1]{0}', space=sflag, size = 0x4, scoped, tag = 'scoped memory for tpu_custom_call.1']
    #allocation10 [shape = 'u8[8192]{0}', space=vmem, size = 0x2000, scoped, tag = 'input window, operand 5, single buffered']
    #allocation11 [shape = 'u8[8192]{0}', space=vmem, size = 0x2000, scoped, tag = 'input window, operand 6, single buffered']
    #allocation12 [shape = 's32[1]{0}', space=sflag, size = 0x4, scoped, tag = 'scoped memory for tpu_custom_call.1']
    #allocation13 [shape = 'u8[512]{0}', space=vmem, size = 0x400, scoped, tag = 'input window, operand 7, single buffered']
    #allocation14 [shape = 'u8[512]{0}', space=vmem, size = 0x400, scoped, tag = 'input window, operand 8, single buffered']
    #allocation15 [shape = 's32[1]{0}', space=sflag, size = 0x4, scoped, tag = 'scoped memory for tpu_custom_call.1']
    #allocation16 [shape = 'u8[8192]{0}', space=vmem, size = 0x2000, scoped, tag = 'input window, operand 11, single buffered']
    #allocation17 [shape = 'u8[8192]{0}', space=vmem, size = 0x2000, scoped, tag = 'output window, operand 0']
    %20 = vsyncpa [#allocation6], 0
    %s21 = scalar_lea.sflag [#allocation6], 1
    %22 = vsyncpa %s21, 0
    %23 = vsyncpa [#allocation9], 0
    %24 = vsyncpa [#allocation12], 0
    %25 = vsyncpa [#allocation15], 0
    %26 = vsyncpa [#allocation7], 0
    %s27 = scalar_lea.sflag [#allocation7], 1
    %28 = vsyncpa %s27, 0
    loop: start=0, step=1, limit=4
    $region2: #{tpu_custom_call.1} parent=1 // loop_pre_header
      _
    $region3: #{tpu_custom_call.1} parent=1 // loop_header
      %s30 = sphi 0, %s34
      %p31 = scmp.ge.s32.totalorder %s30, 4
      %s37 = sphi 0, %s49
      %s38 = sphi 0, %s45
      %s39 = sphi 0, %s37
      %s40 = sphi 0, %s38
      %s41 = sphi 0, %s39
      %s42 = sphi 0, %s40
      %s52 = sphi 0, %s54
      %s55 = sphi 0, %s52
      %s56 = sphi 0, %s55
      %s72 = sphi 0, %s56
      %s78 = sphi 0, %s80
      %s81 = sphi 0, %s78
      %s82 = sphi 0, %s81
      %s98 = sphi 0, %s82
      %s104 = sphi 0, %s106
      %s107 = sphi 0, %s104
      %s108 = sphi 0, %s107
      %s124 = sphi 0, %s108
      %s128 = sphi 0, %s128
      %s130 = sphi 0, %s128
      %s131 = sphi 0, %s130
      %s145 = sphi 0, %s131
      %s149 = sphi 0, %s149
      %s151 = sphi 0, %s149
      %s152 = sphi 0, %s151
      %s166 = sphi 0, %s152
      %s170 = sphi 0, %s170
      %s172 = sphi 0, %s170
      %s173 = sphi 0, %s172
      %s187 = sphi 0, %s173
      %s191 = sphi 0, %s191
      %s193 = sphi 0, %s191
      %s194 = sphi 0, %s193
      %s208 = sphi 0, %s194
      %s212 = sphi 0, %s212
      %s214 = sphi 0, %s212
      %s215 = sphi 0, %s214
      %s229 = sphi 0, %s215
      %s233 = sphi 0, %s233
      %s235 = sphi 0, %s233
      %s236 = sphi 0, %s235
      %s250 = sphi 0, %s236
      %s254 = sphi 0, %s254
      %s256 = sphi 0, %s254
      %s257 = sphi 0, %s256
      %s271 = sphi 0, %s257
      %s275 = sphi 0, %s275
      %s277 = sphi 0, %s275
      %s278 = sphi 0, %s277
      %s292 = sphi 0, %s278
      %s296 = sphi 0, %s296
      %s298 = sphi 0, %s296
      %s299 = sphi 0, %s298
      %s313 = sphi 0, %s299
      %s317 = sphi 0, %s317
      %s319 = sphi 0, %s317
      %s320 = sphi 0, %s319
      %s334 = sphi 0, %s320
      %s338 = sphi 0, %s338
      %s340 = sphi 0, %s338
      %s341 = sphi 0, %s340
      %s355 = sphi 0, %s341
      %s359 = sphi 0, %s359
      %s361 = sphi 0, %s359
      %s362 = sphi 0, %s361
      %s376 = sphi 0, %s362
      %s384 = sphi 0, %s386
      %s387 = sphi 0, %s384
      %s388 = sphi 0, %s387
      %s404 = sphi 0, %s388
    $region4: #{tpu_custom_call.1} parent=1 // loop_header_branch
      %33 = sbr.rel (%p31) target = $region8
    $region5: #{tpu_custom_call.1} parent=1 // loop_body
      %s35 = ssub.s32 %s30, 1
      %s36 = ssub.s32 %s30, 2
      %s43 = sadd.s32 1, %s38
      %p44 = scmp.ge.s32.totalorder %s43, 1
      %s45 = scalar_select %p44, 0, %s43
      %s46 = sadd.s32 1, %s37
      %s47 = scalar_select %p44, %s46, %s37
      %p48 = scmp.ge.s32.totalorder %s47, 2
      %s49 = scalar_select %p48, 0, %s47
      %s50 = ssub.s32 %s37, %s49
      %p51 = scmp.eq.s32.totalorder %s50, 0
      %s53 = sadd.s32 %s52, 1
      %s54 = scalar_select %p51, %s52, %s53
      %p57 = pneg %p51
      %p58 = scmp.eq.s32.totalorder %s30, 1
      %p59 = por %p57, %p58
      %p60 = scmp.ne.s32.totalorder %s52, %s55
      %p61 = scmp.eq.s32.totalorder %s30, 0
      %p62 = por %p60, %p61
      %p63 = scmp.ne.s32.totalorder %s52, %s55
      %p64 = scmp.eq.s32.totalorder %s35, 1
      %p65 = por %p63, %p64
      %p66 = scmp.ne.s32.totalorder %s55, %s56
      %p67 = scmp.eq.s32.totalorder %s35, 0
      %p68 = por %p66, %p67
      %p69 = scmp.ne.s32.totalorder %s55, %s56
      %p70 = scmp.eq.s32.totalorder %s36, 1
      %p71 = por %p69, %p70
      %p73 = scmp.ne.s32.totalorder %s56, %s72
      %p74 = scmp.eq.s32.totalorder %s36, 0
      %p75 = por %p73, %p74
      %s76 = ssub.s32 %s37, %s49
      %p77 = scmp.eq.s32.totalorder %s76, 0
      %s79 = sadd.s32 %s78, 1
      %s80 = scalar_select %p77, %s78, %s79
      %p83 = pneg %p77
      %p84 = scmp.eq.s32.totalorder %s30, 1
      %p85 = por %p83, %p84
      %p86 = scmp.ne.s32.totalorder %s78, %s81
      %p87 = scmp.eq.s32.totalorder %s30, 0
      %p88 = por %p86, %p87
      %p89 = scmp.ne.s32.totalorder %s78, %s81
      %p90 = scmp.eq.s32.totalorder %s35, 1
      %p91 = por %p89, %p90
      %p92 = scmp.ne.s32.totalorder %s81, %s82
      %p93 = scmp.eq.s32.totalorder %s35, 0
      %p94 = por %p92, %p93
      %p95 = scmp.ne.s32.totalorder %s81, %s82
      %p96 = scmp.eq.s32.totalorder %s36, 1
      %p97 = por %p95, %p96
      %p99 = scmp.ne.s32.totalorder %s82, %s98
      %p100 = scmp.eq.s32.totalorder %s36, 0
      %p101 = por %p99, %p100
      %s102 = ssub.s32 %s37, %s49
      %p103 = scmp.eq.s32.totalorder %s102, 0
      %s105 = sadd.s32 %s104, 1
      %s106 = scalar_select %p103, %s104, %s105
      %p109 = pneg %p103
      %p110 = scmp.eq.s32.totalorder %s30, 1
      %p111 = por %p109, %p110
      %p112 = scmp.ne.s32.totalorder %s104, %s107
      %p113 = scmp.eq.s32.totalorder %s30, 0
      %p114 = por %p112, %p113
      %p115 = scmp.ne.s32.totalorder %s104, %s107
      %p116 = scmp.eq.s32.totalorder %s35, 1
      %p117 = por %p115, %p116
      %p118 = scmp.ne.s32.totalorder %s107, %s108
      %p119 = scmp.eq.s32.totalorder %s35, 0
      %p120 = por %p118, %p119
      %p121 = scmp.ne.s32.totalorder %s107, %s108
      %p122 = scmp.eq.s32.totalorder %s36, 1
      %p123 = por %p121, %p122
      %p125 = scmp.ne.s32.totalorder %s108, %s124
      %p126 = scmp.eq.s32.totalorder %s36, 0
      %p127 = por %p125, %p126
      %s129 = sadd.s32 %s128, 1
      %p132 = scmp.eq.s32.totalorder %s30, 1
      %p133 = scmp.ne.s32.totalorder %s128, %s130
      %p134 = scmp.eq.s32.totalorder %s30, 0
      %p135 = por %p133, %p134
      %p136 = scmp.ne.s32.totalorder %s128, %s130
      %p137 = scmp.eq.s32.totalorder %s35, 1
      %p138 = por %p136, %p137
      %p139 = scmp.ne.s32.totalorder %s130, %s131
      %p140 = scmp.eq.s32.totalorder %s35, 0
      %p141 = por %p139, %p140
      %p142 = scmp.ne.s32.totalorder %s130, %s131
      %p143 = scmp.eq.s32.totalorder %s36, 1
      %p144 = por %p142, %p143
      %p146 = scmp.ne.s32.totalorder %s131, %s145
      %p147 = scmp.eq.s32.totalorder %s36, 0
      %p148 = por %p146, %p147
      %s150 = sadd.s32 %s149, 1
      %p153 = scmp.eq.s32.totalorder %s30, 1
      %p154 = scmp.ne.s32.totalorder %s149, %s151
      %p155 = scmp.eq.s32.totalorder %s30, 0
      %p156 = por %p154, %p155
      %p157 = scmp.ne.s32.totalorder %s149, %s151
      %p158 = scmp.eq.s32.totalorder %s35, 1
      %p159 = por %p157, %p158
      %p160 = scmp.ne.s32.totalorder %s151, %s152
      %p161 = scmp.eq.s32.totalorder %s35, 0
      %p162 = por %p160, %p161
      %p163 = scmp.ne.s32.totalorder %s151, %s152
      %p164 = scmp.eq.s32.totalorder %s36, 1
      %p165 = por %p163, %p164
      %p167 = scmp.ne.s32.totalorder %s152, %s166
      %p168 = scmp.eq.s32.totalorder %s36, 0
      %p169 = por %p167, %p168
      %s171 = sadd.s32 %s170, 1
      %p174 = scmp.eq.s32.totalorder %s30, 1
      %p175 = scmp.ne.s32.totalorder %s170, %s172
      %p176 = scmp.eq.s32.totalorder %s30, 0
      %p177 = por %p175, %p176
      %p178 = scmp.ne.s32.totalorder %s170, %s172
      %p179 = scmp.eq.s32.totalorder %s35, 1
      %p180 = por %p178, %p179
      %p181 = scmp.ne.s32.totalorder %s172, %s173
      %p182 = scmp.eq.s32.totalorder %s35, 0
      %p183 = por %p181, %p182
      %p184 = scmp.ne.s32.totalorder %s172, %s173
      %p185 = scmp.eq.s32.totalorder %s36, 1
      %p186 = por %p184, %p185
      %p188 = scmp.ne.s32.totalorder %s173, %s187
      %p189 = scmp.eq.s32.totalorder %s36, 0
      %p190 = por %p188, %p189
      %s192 = sadd.s32 %s191, 1
      %p195 = scmp.eq.s32.totalorder %s30, 1
      %p196 = scmp.ne.s32.totalorder %s191, %s193
      %p197 = scmp.eq.s32.totalorder %s30, 0
      %p198 = por %p196, %p197
      %p199 = scmp.ne.s32.totalorder %s191, %s193
      %p200 = scmp.eq.s32.totalorder %s35, 1
      %p201 = por %p199, %p200
      %p202 = scmp.ne.s32.totalorder %s193, %s194
      %p203 = scmp.eq.s32.totalorder %s35, 0
      %p204 = por %p202, %p203
      %p205 = scmp.ne.s32.totalorder %s193, %s194
      %p206 = scmp.eq.s32.totalorder %s36, 1
      %p207 = por %p205, %p206
      %p209 = scmp.ne.s32.totalorder %s194, %s208
      %p210 = scmp.eq.s32.totalorder %s36, 0
      %p211 = por %p209, %p210
      %s213 = sadd.s32 %s212, 1
      %p216 = scmp.eq.s32.totalorder %s30, 1
      %p217 = scmp.ne.s32.totalorder %s212, %s214
      %p218 = scmp.eq.s32.totalorder %s30, 0
      %p219 = por %p217, %p218
      %p220 = scmp.ne.s32.totalorder %s212, %s214
      %p221 = scmp.eq.s32.totalorder %s35, 1
      %p222 = por %p220, %p221
      %p223 = scmp.ne.s32.totalorder %s214, %s215
      %p224 = scmp.eq.s32.totalorder %s35, 0
      %p225 = por %p223, %p224
      %p226 = scmp.ne.s32.totalorder %s214, %s215
      %p227 = scmp.eq.s32.totalorder %s36, 1
      %p228 = por %p226, %p227
      %p230 = scmp.ne.s32.totalorder %s215, %s229
      %p231 = scmp.eq.s32.totalorder %s36, 0
      %p232 = por %p230, %p231
      %s234 = sadd.s32 %s233, 1
      %p237 = scmp.eq.s32.totalorder %s30, 1
      %p238 = scmp.ne.s32.totalorder %s233, %s235
      %p239 = scmp.eq.s32.totalorder %s30, 0
      %p240 = por %p238, %p239
      %p241 = scmp.ne.s32.totalorder %s233, %s235
      %p242 = scmp.eq.s32.totalorder %s35, 1
      %p243 = por %p241, %p242
      %p244 = scmp.ne.s32.totalorder %s235, %s236
      %p245 = scmp.eq.s32.totalorder %s35, 0
      %p246 = por %p244, %p245
      %p247 = scmp.ne.s32.totalorder %s235, %s236
      %p248 = scmp.eq.s32.totalorder %s36, 1
      %p249 = por %p247, %p248
      %p251 = scmp.ne.s32.totalorder %s236, %s250
      %p252 = scmp.eq.s32.totalorder %s36, 0
      %p253 = por %p251, %p252
      %s255 = sadd.s32 %s254, 1
      %p258 = scmp.eq.s32.totalorder %s30, 1
      %p259 = scmp.ne.s32.totalorder %s254, %s256
      %p260 = scmp.eq.s32.totalorder %s30, 0
      %p261 = por %p259, %p260
      %p262 = scmp.ne.s32.totalorder %s254, %s256
      %p263 = scmp.eq.s32.totalorder %s35, 1
      %p264 = por %p262, %p263
      %p265 = scmp.ne.s32.totalorder %s256, %s257
      %p266 = scmp.eq.s32.totalorder %s35, 0
      %p267 = por %p265, %p266
      %p268 = scmp.ne.s32.totalorder %s256, %s257
      %p269 = scmp.eq.s32.totalorder %s36, 1
      %p270 = por %p268, %p269
      %p272 = scmp.ne.s32.totalorder %s257, %s271
      %p273 = scmp.eq.s32.totalorder %s36, 0
      %p274 = por %p272, %p273
      %s276 = sadd.s32 %s275, 1
      %p279 = scmp.eq.s32.totalorder %s30, 1
      %p280 = scmp.ne.s32.totalorder %s275, %s277
      %p281 = scmp.eq.s32.totalorder %s30, 0
      %p282 = por %p280, %p281
      %p283 = scmp.ne.s32.totalorder %s275, %s277
      %p284 = scmp.eq.s32.totalorder %s35, 1
      %p285 = por %p283, %p284
      %p286 = scmp.ne.s32.totalorder %s277, %s278
      %p287 = scmp.eq.s32.totalorder %s35, 0
      %p288 = por %p286, %p287
      %p289 = scmp.ne.s32.totalorder %s277, %s278
      %p290 = scmp.eq.s32.totalorder %s36, 1
      %p291 = por %p289, %p290
      %p293 = scmp.ne.s32.totalorder %s278, %s292
      %p294 = scmp.eq.s32.totalorder %s36, 0
      %p295 = por %p293, %p294
      %s297 = sadd.s32 %s296, 1
      %p300 = scmp.eq.s32.totalorder %s30, 1
      %p301 = scmp.ne.s32.totalorder %s296, %s298
      %p302 = scmp.eq.s32.totalorder %s30, 0
      %p303 = por %p301, %p302
      %p304 = scmp.ne.s32.totalorder %s296, %s298
      %p305 = scmp.eq.s32.totalorder %s35, 1
      %p306 = por %p304, %p305
      %p307 = scmp.ne.s32.totalorder %s298, %s299
      %p308 = scmp.eq.s32.totalorder %s35, 0
      %p309 = por %p307, %p308
      %p310 = scmp.ne.s32.totalorder %s298, %s299
      %p311 = scmp.eq.s32.totalorder %s36, 1
      %p312 = por %p310, %p311
      %p314 = scmp.ne.s32.totalorder %s299, %s313
      %p315 = scmp.eq.s32.totalorder %s36, 0
      %p316 = por %p314, %p315
      %s318 = sadd.s32 %s317, 1
      %p321 = scmp.eq.s32.totalorder %s30, 1
      %p322 = scmp.ne.s32.totalorder %s317, %s319
      %p323 = scmp.eq.s32.totalorder %s30, 0
      %p324 = por %p322, %p323
      %p325 = scmp.ne.s32.totalorder %s317, %s319
      %p326 = scmp.eq.s32.totalorder %s35, 1
      %p327 = por %p325, %p326
      %p328 = scmp.ne.s32.totalorder %s319, %s320
      %p329 = scmp.eq.s32.totalorder %s35, 0
      %p330 = por %p328, %p329
      %p331 = scmp.ne.s32.totalorder %s319, %s320
      %p332 = scmp.eq.s32.totalorder %s36, 1
      %p333 = por %p331, %p332
      %p335 = scmp.ne.s32.totalorder %s320, %s334
      %p336 = scmp.eq.s32.totalorder %s36, 0
      %p337 = por %p335, %p336
      %s339 = sadd.s32 %s338, 1
      %p342 = scmp.eq.s32.totalorder %s30, 1
      %p343 = scmp.ne.s32.totalorder %s338, %s340
      %p344 = scmp.eq.s32.totalorder %s30, 0
      %p345 = por %p343, %p344
      %p346 = scmp.ne.s32.totalorder %s338, %s340
      %p347 = scmp.eq.s32.totalorder %s35, 1
      %p348 = por %p346, %p347
      %p349 = scmp.ne.s32.totalorder %s340, %s341
      %p350 = scmp.eq.s32.totalorder %s35, 0
      %p351 = por %p349, %p350
      %p352 = scmp.ne.s32.totalorder %s340, %s341
      %p353 = scmp.eq.s32.totalorder %s36, 1
      %p354 = por %p352, %p353
      %p356 = scmp.ne.s32.totalorder %s341, %s355
      %p357 = scmp.eq.s32.totalorder %s36, 0
      %p358 = por %p356, %p357
      %s360 = sadd.s32 %s359, 1
      %p363 = scmp.eq.s32.totalorder %s30, 1
      %p364 = scmp.ne.s32.totalorder %s359, %s361
      %p365 = scmp.eq.s32.totalorder %s30, 0
      %p366 = por %p364, %p365
      %p367 = scmp.ne.s32.totalorder %s359, %s361
      %p368 = scmp.eq.s32.totalorder %s35, 1
      %p369 = por %p367, %p368
      %p370 = scmp.ne.s32.totalorder %s361, %s362
      %p371 = scmp.eq.s32.totalorder %s35, 0
      %p372 = por %p370, %p371
      %p373 = scmp.ne.s32.totalorder %s361, %s362
      %p374 = scmp.eq.s32.totalorder %s36, 1
      %p375 = por %p373, %p374
      %p377 = scmp.ne.s32.totalorder %s362, %s376
      %p378 = scmp.eq.s32.totalorder %s36, 0
      %p379 = por %p377, %p378
      %s380 = ssub.s32 %s37, %s49
      %s381 = ssub.s32 %s38, %s45
      %s382 = sor.u32 %s380, %s381
      %p383 = scmp.eq.s32.totalorder %s382, 0
      %s385 = sadd.s32 %s384, 1
      %s386 = scalar_select %p383, %s384, %s385
      %p389 = pneg %p383
      %p390 = scmp.eq.s32.totalorder %s30, 1
      %p391 = por %p389, %p390
      %p392 = scmp.ne.s32.totalorder %s384, %s387
      %p393 = scmp.eq.s32.totalorder %s30, 0
      %p394 = por %p392, %p393
      %p395 = scmp.ne.s32.totalorder %s384, %s387
      %p396 = scmp.eq.s32.totalorder %s35, 1
      %p397 = por %p395, %p396
      %p398 = scmp.ne.s32.totalorder %s387, %s388
      %p399 = scmp.eq.s32.totalorder %s35, 0
      %p400 = por %p398, %p399
      %p401 = scmp.ne.s32.totalorder %s387, %s388
      %p402 = scmp.eq.s32.totalorder %s36, 1
      %p403 = por %p401, %p402
      %p405 = scmp.ne.s32.totalorder %s388, %s404
      %p406 = scmp.eq.s32.totalorder %s36, 0
      %p407 = por %p405, %p406
      %p408 = scmp.le.s32.totalorder 1, %s30
      %p409 = scmp.lt.s32.totalorder %s30, 3
      %p410 = pnand %p408, %p409
      %p411 = pneg %p410
      // Predicated region
      $region9: #{tpu_custom_call.1} parent=5 // pred_check
        _
      $region10: #{tpu_custom_call.1} parent=5 // pred_check_branch
        %413 = sbr.rel (%p410) target = $region12
      $region11: #{tpu_custom_call.1} parent=5 // pred_region
        %s414 = ssub.s32 %s30, 1
        // Predicated region
        $region13: #{tpu_custom_call.1} parent=11 // pred_check
          %p415 = pneg %p141
        $region14: #{tpu_custom_call.1} parent=11 // pred_check_branch
          %417 = sbr.rel (%p415) target = $region16
        $region15: #{tpu_custom_call.1} parent=11 // pred_region
          %s419 = ssub.s32 256, 256
          %420 = vsyncadd [#allocation9], %s419
          %s421 = sshll.u32 [#allocation8], 4
          %s422 = int_to_ptr.vmem [resolvable:$true] %s421
          %427 = dma.hbm_to_vmem [thread:$0]  %s3, 256, %s422, [#allocation9], 64, 64, 4
        $region16: #{tpu_custom_call.1} parent=11 // pred_fallthru
          _
        // Predicated region
        $region17: #{tpu_custom_call.1} parent=11 // pred_check
          %p428 = pneg %p162
        $region18: #{tpu_custom_call.1} parent=11 // pred_check_branch
          %430 = sbr.rel (%p428) target = $region20
        $region19: #{tpu_custom_call.1} parent=11 // pred_region
          _
        $region20: #{tpu_custom_call.1} parent=11 // pred_fallthru
          _
        // Predicated region
        $region21: #{tpu_custom_call.1} parent=11 // pred_check
          %p431 = pneg %p183
        $region22: #{tpu_custom_call.1} parent=11 // pred_check_branch
          %433 = sbr.rel (%p431) target = $region24
        $region23: #{tpu_custom_call.1} parent=11 // pred_region
          %s435 = ssub.s32 256, 256
          %436 = vsyncadd [#allocation9], %s435
          %s437 = sshll.u32 [#allocation10], 4
          %s438 = int_to_ptr.vmem [resolvable:$true] %s437
          %443 = dma.hbm_to_vmem [thread:$0]  %s5, 256, %s438, [#allocation9], 64, 64, 4
        $region24: #{tpu_custom_call.1} parent=11 // pred_fallthru
          _
        // Predicated region
        $region25: #{tpu_custom_call.1} parent=11 // pred_check
          %p444 = pneg %p204
        $region26: #{tpu_custom_call.1} parent=11 // pred_check_branch
          %446 = sbr.rel (%p444) target = $region28
        $region27: #{tpu_custom_call.1} parent=11 // pred_region
          %s448 = ssub.s32 256, 256
          %449 = vsyncadd [#allocation12], %s448
          %s450 = sshll.u32 [#allocation11], 4
          %s451 = int_to_ptr.vmem [resolvable:$true] %s450
          %456 = dma.hbm_to_vmem [thread:$0]  %s6, 256, %s451, [#allocation12], 64, 64, 4
        $region28: #{tpu_custom_call.1} parent=11 // pred_fallthru
          _
        // Predicated region
        $region29: #{tpu_custom_call.1} parent=11 // pred_check
          %p457 = pneg %p225
        $region30: #{tpu_custom_call.1} parent=11 // pred_check_branch
          %459 = sbr.rel (%p457) target = $region32
        $region31: #{tpu_custom_call.1} parent=11 // pred_region
          %s461 = ssub.s32 16, 16
          %462 = vsyncadd [#allocation12], %s461
          %s464 = sshll.u32 [#allocation13], 4
          %s465 = int_to_ptr.vmem [resolvable:$true] %s464
          %467 = dma.hbm_to_vmem [thread:$0]  %s7, 16, %s465, [#allocation12]
        $region32: #{tpu_custom_call.1} parent=11 // pred_fallthru
          _
        // Predicated region
        $region33: #{tpu_custom_call.1} parent=11 // pred_check
          %p468 = pneg %p246
        $region34: #{tpu_custom_call.1} parent=11 // pred_check_branch
          %470 = sbr.rel (%p468) target = $region36
        $region35: #{tpu_custom_call.1} parent=11 // pred_region
          %s472 = ssub.s32 16, 16
          %473 = vsyncadd [#allocation15], %s472
          %s475 = sshll.u32 [#allocation14], 4
          %s476 = int_to_ptr.vmem [resolvable:$true] %s475
          %478 = dma.hbm_to_vmem [thread:$0]  %s8, 16, %s476, [#allocation15]
        $region36: #{tpu_custom_call.1} parent=11 // pred_fallthru
          _
        // Predicated region
        $region37: #{tpu_custom_call.1} parent=11 // pred_check
          %p479 = pneg %p267
        $region38: #{tpu_custom_call.1} parent=11 // pred_check_branch
          %481 = sbr.rel (%p479) target = $region40
        $region39: #{tpu_custom_call.1} parent=11 // pred_region
          _
        $region40: #{tpu_custom_call.1} parent=11 // pred_fallthru
          _
        // Predicated region
        $region41: #{tpu_custom_call.1} parent=11 // pred_check
          %p482 = pneg %p288
        $region42: #{tpu_custom_call.1} parent=11 // pred_check_branch
          %484 = sbr.rel (%p482) target = $region44
        $region43: #{tpu_custom_call.1} parent=11 // pred_region
          _
        $region44: #{tpu_custom_call.1} parent=11 // pred_fallthru
          _
        // Predicated region
        $region45: #{tpu_custom_call.1} parent=11 // pred_check
          %p485 = pneg %p309
        $region46: #{tpu_custom_call.1} parent=11 // pred_check_branch
          %487 = sbr.rel (%p485) target = $region48
        $region47: #{tpu_custom_call.1} parent=11 // pred_region
          %s489 = ssub.s32 256, 256
          %490 = vsyncadd [#allocation15], %s489
          %s491 = sshll.u32 [#allocation16], 4
          %s492 = int_to_ptr.vmem [resolvable:$true] %s491
          %497 = dma.hbm_to_vmem [thread:$0]  %s11, 256, %s492, [#allocation15], 64, 64, 4
        $region48: #{tpu_custom_call.1} parent=11 // pred_fallthru
          _
        // Predicated region
        $region49: #{tpu_custom_call.1} parent=11 // pred_check
          %p498 = pneg %p330
        $region50: #{tpu_custom_call.1} parent=11 // pred_check_branch
          %500 = sbr.rel (%p498) target = $region52
        $region51: #{tpu_custom_call.1} parent=11 // pred_region
          _
        $region52: #{tpu_custom_call.1} parent=11 // pred_fallthru
          _
        // Predicated region
        $region53: #{tpu_custom_call.1} parent=11 // pred_check
          %p501 = pneg %p351
        $region54: #{tpu_custom_call.1} parent=11 // pred_check_branch
          %503 = sbr.rel (%p501) target = $region56
        $region55: #{tpu_custom_call.1} parent=11 // pred_region
          _
        $region56: #{tpu_custom_call.1} parent=11 // pred_fallthru
          _
        // Predicated region
        $region57: #{tpu_custom_call.1} parent=11 // pred_check
          %p504 = pneg %p372
        $region58: #{tpu_custom_call.1} parent=11 // pred_check_branch
          %506 = sbr.rel (%p504) target = $region60
        $region59: #{tpu_custom_call.1} parent=11 // pred_region
          _
        $region60: #{tpu_custom_call.1} parent=11 // pred_fallthru
          _
      $region12: #{tpu_custom_call.1} parent=5 // pred_fallthru
        _
      %p507 = scmp.lt.s32.totalorder %s30, 2
      // Predicated region
      $region61: #{tpu_custom_call.1} parent=5 // pred_check
        %p508 = pneg %p507
      $region62: #{tpu_custom_call.1} parent=5 // pred_check_branch
        %510 = sbr.rel (%p508) target = $region64
      $region63: #{tpu_custom_call.1} parent=5 // pred_region
        // Predicated region
        $region65: #{tpu_custom_call.1} parent=63 // pred_check
          %p511 = pneg %p62
        $region66: #{tpu_custom_call.1} parent=63 // pred_check_branch
          %513 = sbr.rel (%p511) target = $region68
        $region67: #{tpu_custom_call.1} parent=63 // pred_region
          %p514 = scmp.lt.s32.totalorder %s37, 1
          %s515 = scalar_select %p514, %s37, 1
          %s516 = smul.addr %s515, 8
          %s517 = scalar_lea.vmem %s0, %s516
        $region68: #{tpu_custom_call.1} parent=63 // pred_fallthru
          _
        // Predicated region
        $region69: #{tpu_custom_call.1} parent=63 // pred_check
          %p518 = pneg %p88
        $region70: #{tpu_custom_call.1} parent=63 // pred_check_branch
          %520 = sbr.rel (%p518) target = $region72
        $region71: #{tpu_custom_call.1} parent=63 // pred_region
          %p521 = scmp.lt.s32.totalorder %s37, 1
          %s522 = scalar_select %p521, %s37, 1
          %s523 = smul.addr %s522, 8
          %s524 = scalar_lea.vmem %s1, %s523
        $region72: #{tpu_custom_call.1} parent=63 // pred_fallthru
          _
        // Predicated region
        $region73: #{tpu_custom_call.1} parent=63 // pred_check
          %p525 = pneg %p114
        $region74: #{tpu_custom_call.1} parent=63 // pred_check_branch
          %527 = sbr.rel (%p525) target = $region76
        $region75: #{tpu_custom_call.1} parent=63 // pred_region
          %s528 = sand.u32 %s104, 1
          %s529 = scalar_lea.sflag [#allocation6], %s528
          %s530 = sand.u32 %s104, 1
          %s531 = scalar_lea.vmem [#allocation5], %s530
          %s533 = ssub.s32 16, 16
          %534 = vsyncadd %s529, %s533
          %s535 = smul.addr %s37, 16
          %s536 = scalar_lea.hbm %s2, %s535
          %s538 = sshll.u32 %s531, 4
          %s539 = int_to_ptr.vmem [resolvable:$true] %s538
          %541 = dma.hbm_to_vmem [thread:$0]  %s536, 16, %s539, %s529
        $region76: #{tpu_custom_call.1} parent=63 // pred_fallthru
          _
      $region64: #{tpu_custom_call.1} parent=5 // pred_fallthru
        _
      %p542 = scmp.le.s32.totalorder 1, %s30
      %p543 = scmp.lt.s32.totalorder %s30, 3
      %p544 = pnand %p542, %p543
      %p545 = pneg %p544
      // Predicated region
      $region77: #{tpu_custom_call.1} parent=5 // pred_check
        _
      $region78: #{tpu_custom_call.1} parent=5 // pred_check_branch
        %547 = sbr.rel (%p544) target = $region80
      $region79: #{tpu_custom_call.1} parent=5 // pred_region
        %s548 = ssub.s32 %s30, 1
        %s549 = sand.u32 %s107, 1
        %s550 = scalar_lea.sflag [#allocation6], %s549
        %s551 = sand.u32 %s107, 1
        %s552 = scalar_lea.vmem [#allocation5], %s551
        // Predicated region
        $region81: #{tpu_custom_call.1} parent=79 // pred_check
          %p553 = pneg %p120
        $region82: #{tpu_custom_call.1} parent=79 // pred_check_branch
          %555 = sbr.rel (%p553) target = $region84
        $region83: #{tpu_custom_call.1} parent=79 // pred_region
          %556 = dma.done %s550, 16
        $region84: #{tpu_custom_call.1} parent=79 // pred_fallthru
          _
        // Predicated region
        $region85: #{tpu_custom_call.1} parent=79 // pred_check
          %p557 = pneg %p141
        $region86: #{tpu_custom_call.1} parent=79 // pred_check_branch
          %559 = sbr.rel (%p557) target = $region88
        $region87: #{tpu_custom_call.1} parent=79 // pred_region
          %560 = dma.done [#allocation9], 256
        $region88: #{tpu_custom_call.1} parent=79 // pred_fallthru
          _
        // Predicated region
        $region89: #{tpu_custom_call.1} parent=79 // pred_check
          %p561 = pneg %p183
        $region90: #{tpu_custom_call.1} parent=79 // pred_check_branch
          %563 = sbr.rel (%p561) target = $region92
        $region91: #{tpu_custom_call.1} parent=79 // pred_region
          %564 = dma.done [#allocation9], 256
        $region92: #{tpu_custom_call.1} parent=79 // pred_fallthru
          _
        // Predicated region
        $region93: #{tpu_custom_call.1} parent=79 // pred_check
          %p565 = pneg %p204
        $region94: #{tpu_custom_call.1} parent=79 // pred_check_branch
          %567 = sbr.rel (%p565) target = $region96
        $region95: #{tpu_custom_call.1} parent=79 // pred_region
          %568 = dma.done [#allocation12], 256
        $region96: #{tpu_custom_call.1} parent=79 // pred_fallthru
          _
        // Predicated region
        $region97: #{tpu_custom_call.1} parent=79 // pred_check
          %p569 = pneg %p225
        $region98: #{tpu_custom_call.1} parent=79 // pred_check_branch
          %571 = sbr.rel (%p569) target = $region100
        $region99: #{tpu_custom_call.1} parent=79 // pred_region
          %572 = dma.done [#allocation12], 16
        $region100: #{tpu_custom_call.1} parent=79 // pred_fallthru
          _
        // Predicated region
        $region101: #{tpu_custom_call.1} parent=79 // pred_check
          %p573 = pneg %p246
        $region102: #{tpu_custom_call.1} parent=79 // pred_check_branch
          %575 = sbr.rel (%p573) target = $region104
        $region103: #{tpu_custom_call.1} parent=79 // pred_region
          %576 = dma.done [#allocation15], 16
        $region104: #{tpu_custom_call.1} parent=79 // pred_fallthru
          _
        // Predicated region
        $region105: #{tpu_custom_call.1} parent=79 // pred_check
          %p577 = pneg %p309
        $region106: #{tpu_custom_call.1} parent=79 // pred_check_branch
          %579 = sbr.rel (%p577) target = $region108
        $region107: #{tpu_custom_call.1} parent=79 // pred_region
          %580 = dma.done [#allocation15], 256
        $region108: #{tpu_custom_call.1} parent=79 // pred_fallthru
          _
        %p581 = scmp.lt.s32.totalorder %s39, 1
        %s582 = scalar_select %p581, %s39, 1
        %s583 = smul.addr %s582, 8
        %s584 = scalar_lea.vmem %s0, %s583
        %p585 = pneg %p68
        %p586 = pneg %p65
        %p587 = scmp.lt.s32.totalorder %s39, 1
        %s588 = scalar_select %p587, %s39, 1
        %s589 = smul.addr %s588, 8
        %s590 = scalar_lea.vmem %s1, %s589
        %p591 = pneg %p94
        %p592 = pneg %p91
        %s593 = sand.u32 %s107, 1
        %s594 = scalar_lea.sflag [#allocation6], %s593
        %s595 = sand.u32 %s107, 1
        %s596 = scalar_lea.vmem [#allocation5], %s595
        %p597 = pneg %p120
        %p598 = pneg %p117
        %p599 = pneg %p141
        %p600 = pneg %p138
        %p601 = pneg %p162
        %p602 = pneg %p159
        %p603 = pneg %p183
        %p604 = pneg %p180
        %p605 = pneg %p204
        %p606 = pneg %p201
        %p607 = pneg %p225
        %p608 = pneg %p222
        %p609 = pneg %p246
        %p610 = pneg %p243
        %p611 = pneg %p267
        %p612 = pneg %p264
        %p613 = pneg %p288
        %p614 = pneg %p285
        %p615 = pneg %p309
        %p616 = pneg %p306
        %p617 = pneg %p330
        %p618 = pneg %p327
        %p619 = pneg %p351
        %p620 = pneg %p348
        %p621 = pneg %p372
        %p622 = pneg %p369
        %p623 = pneg %p400
        %p624 = pneg %p397
        %s625 = sand.u32 %s387, 1
        %s626 = scalar_lea.sflag [#allocation7], %s625
        %s627 = sand.u32 %s387, 1
        %s628 = smul.addr %s627, 8
        %s629 = scalar_lea.vmem [#allocation17], %s628
        %p630 = scmp.lt.s32.totalorder %s39, 1
        %s631 = scalar_select %p630, %s39, 1
        %s632 = smul.addr %s631, 8
        %s633 = scalar_lea.vmem %s0, %s632
        %p634 = scmp.lt.s32.totalorder %s39, 1
        %s635 = scalar_select %p634, %s39, 1
        %s636 = smul.addr %s635, 8
        %s637 = scalar_lea.vmem %s1, %s636
        %v639 = vld [vmem:[%s552] sm:$0x1]
        %p640 = scmp.eq.s32.totalorder %s40, 0
        // Predicated region
        $region109: #{tpu_custom_call.1} parent=79 // pred_check
          %p641 = pneg %p640
        $region110: #{tpu_custom_call.1} parent=79 // pred_check_branch
          %643 = sbr.rel (%p641) target = $region112
        $region111: #{tpu_custom_call.1} parent=79 // pred_region
          %v644 = vld [vmem:[%s633] sm:$0xff]
          %v645 = vpack.c.bf16 %v644, %v644
          %v646 = vld [vmem:[%s637] sm:$0xff]
          %v647 = vld [vmem:[%s4] sm:$0xf]
          %v648 = vld [vmem:[%s4 + $0x4] sm:$0xf]
          %v649 = vld [vmem:[%s4 + $0x8] sm:$0xf]
          %v650 = vld [vmem:[%s4 + $0xc] sm:$0xf]
          %v655 = vunpack.c.l.b16 %v647
          %v656 = vunpack.c.l.b16 %v648
          %v657 = vunpack.c.l.b16 %v649
          %v658 = vunpack.c.l.b16 %v650
          %v659 = vpack.c.b16 %v656, %v655
          %v660 = vpack.c.b16 %v658, %v657
          %vm663 = vcmask 261120
          %v665 = vsel %vm663, %v645, 0
          %667 = vmatprep.subr.bf16.mxu0 0
          %668 = vmatpush1.bf16.msra.mxu0 %v659
          %669 = vmatprep.subr.bf16.mxu0 0
          %670 = vmatpush1.bf16.msra.mxu0 %v660
          %671 = vmatprep.subr.bf16.mxu0 0
          %672 = vmatpush1.bf16.msra.mxu0 0
          %673 = vmatprep.subr.bf16.mxu0 0
          %674 = vmatpush1.bf16.msra.mxu0 0
          %675 = vmatprep.subr.bf16.mxu0 0
          %676 = vmatpush1.bf16.msra.mxu0 0
          %677 = vmatprep.subr.bf16.mxu0 0
          %678 = vmatpush1.bf16.msra.mxu0 0
          %679 = vmatprep.subr.bf16.mxu0 0
          %680 = vmatpush1.bf16.msra.mxu0 0
          %681 = vmatprep.subr.bf16.mxu0 0
          %682 = vmatpush1.bf16.msra.mxu0 0
          %683 = vmatprep.subr.bf16.mxu0 0
          %684 = vmatpush1.bf16.msra.mxu0 0
          %685 = vmatprep.subr.bf16.mxu0 0
          %686 = vmatpush1.bf16.msra.mxu0 0
          %687 = vmatprep.subr.bf16.mxu0 0
          %688 = vmatpush1.bf16.msra.mxu0 0
          %689 = vmatprep.subr.bf16.mxu0 0
          %690 = vmatpush1.bf16.msra.mxu0 0
          %691 = vmatprep.subr.bf16.mxu0 0
          %692 = vmatpush1.bf16.msra.mxu0 0
          %693 = vmatprep.subr.bf16.mxu0 0
          %694 = vmatpush1.bf16.msra.mxu0 0
          %695 = vmatprep.subr.bf16.mxu0 0
          %696 = vmatpush1.bf16.msra.mxu0 0
          %697 = vmatprep.subr.bf16.mxu0 0
          %698 = vmatpush1.bf16.msra.mxu0 0
          %699 = vmatprep.mubr.bf16.mxu0 0
          %700 = vmatmul.mubr.bf16.gmra.mrb[0].mxu0 %v665
          %v701 = vpop.f32.mrb[0].mxu0
          %v702 = vadd.f32 0.0, %v701
          %v703 = vpop.f32.mrb[0].mxu0
          %v704 = vpop.f32.mrb[0].mxu0
          %v705 = vpop.f32.mrb[0].mxu0
          %706 = vdwg.mxu0
          %708 = vset.pattern.permute.xlu0 0
          %709 = vperm.xlu0 %708, %v646
          %v710 = vpop.permute.xlu0 %709
          %v712 = vmul.f32 %v702, %v710
          %v713 = vld [vmem:[#allocation10] sm:$0xf]
          %v714 = vld [vmem:[#allocation10 + $0x4] sm:$0xf]
          %v715 = vld [vmem:[#allocation10 + $0x8] sm:$0xf]
          %v716 = vld [vmem:[#allocation10 + $0xc] sm:$0xf]
          %v721 = vunpack.c.l.b16 %v713
          %v722 = vunpack.c.l.b16 %v714
          %v723 = vunpack.c.l.b16 %v715
          %v724 = vunpack.c.l.b16 %v716
          %v725 = vpack.c.b16 %v722, %v721
          %v726 = vpack.c.b16 %v724, %v723
          %729 = vmatprep.subr.bf16.mxu0 0
          %730 = vmatpush1.bf16.msra.mxu0 %v725
          %731 = vmatprep.subr.bf16.mxu0 0
          %732 = vmatpush1.bf16.msra.mxu0 %v726
          %733 = vmatprep.subr.bf16.mxu0 0
          %734 = vmatpush1.bf16.msra.mxu0 0
          %735 = vmatprep.subr.bf16.mxu0 0
          %736 = vmatpush1.bf16.msra.mxu0 0
          %737 = vmatprep.subr.bf16.mxu0 0
          %738 = vmatpush1.bf16.msra.mxu0 0
          %739 = vmatprep.subr.bf16.mxu0 0
          %740 = vmatpush1.bf16.msra.mxu0 0
          %741 = vmatprep.subr.bf16.mxu0 0
          %742 = vmatpush1.bf16.msra.mxu0 0
          %743 = vmatprep.subr.bf16.mxu0 0
          %744 = vmatpush1.bf16.msra.mxu0 0
          %745 = vmatprep.subr.bf16.mxu0 0
          %746 = vmatpush1.bf16.msra.mxu0 0
          %747 = vmatprep.subr.bf16.mxu0 0
          %748 = vmatpush1.bf16.msra.mxu0 0
          %749 = vmatprep.subr.bf16.mxu0 0
          %750 = vmatpush1.bf16.msra.mxu0 0
          %751 = vmatprep.subr.bf16.mxu0 0
          %752 = vmatpush1.bf16.msra.mxu0 0
          %753 = vmatprep.subr.bf16.mxu0 0
          %754 = vmatpush1.bf16.msra.mxu0 0
          %755 = vmatprep.subr.bf16.mxu0 0
          %756 = vmatpush1.bf16.msra.mxu0 0
          %757 = vmatprep.subr.bf16.mxu0 0
          %758 = vmatpush1.bf16.msra.mxu0 0
          %759 = vmatprep.subr.bf16.mxu0 0
          %760 = vmatpush1.bf16.msra.mxu0 0
          %761 = vmatprep.mubr.bf16.mxu0 0
          %762 = vmatmul.mubr.bf16.gmra.mrb[0].mxu0 %v665
          %v763 = vpop.f32.mrb[0].mxu0
          %v764 = vadd.f32 0.0, %v763
          %v765 = vpop.f32.mrb[0].mxu0
          %v766 = vpop.f32.mrb[0].mxu0
          %v767 = vpop.f32.mrb[0].mxu0
          %768 = vdwg.mxu0
          %v769 = vmul.f32 %v764, %v710
          %v770 = vpack.c.bf16 %v712, %v712
          %vm771 = vcmask 257024
          %772 = vst.msk [vmem:[#allocation2] sm:$0xf] %vm771, %v770
          %v773 = vpack.c.bf16 %v769, %v769
          %774 = vst.msk [vmem:[#allocation3] sm:$0xf] %vm771, %v773
        $region112: #{tpu_custom_call.1} parent=79 // pred_fallthru
          _
        %s775 = smul.u32 %s40, 8
        %s776 = scalar_lea.vmem %s633, %s775
        %v777 = vld [vmem:[%s776] sm:$0xff]
        %s778 = scalar_lea.vmem %s637, %s775
        %v779 = vld [vmem:[%s778] sm:$0xff]
        %v780 = vpack.c.bf16 %v777, %v777
        %v781 = vld [vmem:[#allocation8] sm:$0xf]
        %v782 = vld [vmem:[#allocation8 + $0x4] sm:$0xf]
        %v783 = vld [vmem:[#allocation8 + $0x8] sm:$0xf]
        %v784 = vld [vmem:[#allocation8 + $0xc] sm:$0xf]
        %v789 = vunpack.c.l.b16 %v781
        %v790 = vunpack.c.l.b16 %v782
        %v791 = vunpack.c.l.b16 %v783
        %v792 = vunpack.c.l.b16 %v784
        %v793 = vpack.c.b16 %v790, %v789
        %v794 = vpack.c.b16 %v792, %v791
        %vm797 = vcmask 261120
        %v799 = vsel %vm797, %v780, 0
        %801 = vmatprep.subr.bf16.mxu0 0
        %802 = vmatpush1.bf16.msra.mxu0 %v793
        %803 = vmatprep.subr.bf16.mxu0 0
        %804 = vmatpush1.bf16.msra.mxu0 %v794
        %805 = vmatprep.subr.bf16.mxu0 0
        %806 = vmatpush1.bf16.msra.mxu0 0
        %807 = vmatprep.subr.bf16.mxu0 0
        %808 = vmatpush1.bf16.msra.mxu0 0
        %809 = vmatprep.subr.bf16.mxu0 0
        %810 = vmatpush1.bf16.msra.mxu0 0
        %811 = vmatprep.subr.bf16.mxu0 0
        %812 = vmatpush1.bf16.msra.mxu0 0
        %813 = vmatprep.subr.bf16.mxu0 0
        %814 = vmatpush1.bf16.msra.mxu0 0
        %815 = vmatprep.subr.bf16.mxu0 0
        %816 = vmatpush1.bf16.msra.mxu0 0
        %817 = vmatprep.subr.bf16.mxu0 0
        %818 = vmatpush1.bf16.msra.mxu0 0
        %819 = vmatprep.subr.bf16.mxu0 0
        %820 = vmatpush1.bf16.msra.mxu0 0
        %821 = vmatprep.subr.bf16.mxu0 0
        %822 = vmatpush1.bf16.msra.mxu0 0
        %823 = vmatprep.subr.bf16.mxu0 0
        %824 = vmatpush1.bf16.msra.mxu0 0
        %825 = vmatprep.subr.bf16.mxu0 0
        %826 = vmatpush1.bf16.msra.mxu0 0
        %827 = vmatprep.subr.bf16.mxu0 0
        %828 = vmatpush1.bf16.msra.mxu0 0
        %829 = vmatprep.subr.bf16.mxu0 0
        %830 = vmatpush1.bf16.msra.mxu0 0
        %831 = vmatprep.subr.bf16.mxu0 0
        %832 = vmatpush1.bf16.msra.mxu0 0
        %833 = vmatprep.mubr.bf16.mxu0 0
        %834 = vmatmul.mubr.bf16.gmra.mrb[0].mxu0 %v799
        %v835 = vpop.f32.mrb[0].mxu0
        %v836 = vadd.f32 0.0, %v835
        %v837 = vpop.f32.mrb[0].mxu0
        %v838 = vpop.f32.mrb[0].mxu0
        %v839 = vpop.f32.mrb[0].mxu0
        %840 = vdwg.mxu0
        %v841 = vmul.f32 %v779, 0.35355338
        %843 = vset.pattern.permute.xlu0 0
        %844 = vperm.xlu0 %843, %v841
        %v845 = vpop.permute.xlu0 %844
        %v847 = vmul.f32 %v836, %v845
        %v848 = vpack.c.bf16 %v847, %v847
        %850 = vset.pattern.permute.xlu0 0
        %851 = vperm.xlu0 %850, %v779
        %v852 = vpop.permute.xlu0 %851
        %v855 = vlaneseq
        %v856 = vshrl.u32 %v855, 7
        %v857 = vsub.s32 0, %v856
        %v858 = vrot.slane %v639, %v857
        %v860 = vmul.f32 %v852, %v858
        %v861 = vsub.f32 1.0, %v860
        %v862 = vmul.f32 %v861, -3535.534
        %v863 = vld [vmem:[#allocation2] sm:$0xf]
        %v864 = vld [vmem:[#allocation3] sm:$0xf]
        %vm865 = vcmask 64512
        %v867 = vsel %vm865, %v848, 0
        %v870 = vsel %vm865, %v863, 0
        %872 = vmatprep.subr.bf16.mxu0 0
        %873 = vmatpush1.bf16.xpose.msra.mxu0 %v870
        %874 = vmatprep.subr.bf16.mxu0 0
        %875 = vmatpush1.bf16.xpose.msra.mxu0 0
        %876 = vmatprep.subr.bf16.mxu0 0
        %877 = vmatpush1.bf16.xpose.msra.mxu0 0
        %878 = vmatprep.subr.bf16.mxu0 0
        %879 = vmatpush1.bf16.xpose.msra.mxu0 0
        %880 = vmatprep.subr.bf16.mxu0 0
        %881 = vmatpush1.bf16.xpose.msra.mxu0 0
        %882 = vmatprep.subr.bf16.mxu0 0
        %883 = vmatpush1.bf16.xpose.msra.mxu0 0
        %884 = vmatprep.subr.bf16.mxu0 0
        %885 = vmatpush1.bf16.xpose.msra.mxu0 0
        %886 = vmatprep.subr.bf16.mxu0 0
        %887 = vmatpush1.bf16.xpose.msra.mxu0 0
        %888 = vmatprep.subr.bf16.mxu0 0
        %889 = vmatpush1.bf16.xpose.msra.mxu0 0
        %890 = vmatprep.subr.bf16.mxu0 0
        %891 = vmatpush1.bf16.xpose.msra.mxu0 0
        %892 = vmatprep.subr.bf16.mxu0 0
        %893 = vmatpush1.bf16.xpose.msra.mxu0 0
        %894 = vmatprep.subr.bf16.mxu0 0
        %895 = vmatpush1.bf16.xpose.msra.mxu0 0
        %896 = vmatprep.subr.bf16.mxu0 0
        %897 = vmatpush1.bf16.xpose.msra.mxu0 0
        %898 = vmatprep.subr.bf16.mxu0 0
        %899 = vmatpush1.bf16.xpose.msra.mxu0 0
        %900 = vmatprep.subr.bf16.mxu0 0
        %901 = vmatpush1.bf16.xpose.msra.mxu0 0
        %902 = vmatprep.subr.bf16.mxu0 0
        %903 = vmatpush1.bf16.xpose.msra.mxu0 0
        %904 = vmatprep.mubr.bf16.mxu0 0
        %905 = vmatmul.mubr.bf16.gmra.mrb[0].mxu0 %v867
        %v906 = vpop.f32.mrb[0].mxu0
        %v907 = vadd.f32 %v862, %v906
        %v908 = vpop.f32.mrb[0].mxu0
        %v909 = vpop.f32.mrb[0].mxu0
        %v910 = vpop.f32.mrb[0].mxu0
        %911 = vdwg.mxu0
        %v912 = vsel %vm865, %v907, -inf
        %913 = vmax.xlane.f32.xlu0 %v912
        %v914 = vpop.xlane.xlu0 %913
        %v915 = vsub.f32 %v907, %v914
        %v916 = vmul.f32 %v915, 1.442695
        %v917 = vpow.pop %v916
        %v918 = vsel %vm865, %v917, 0.0
        %919 = vadd.xlane.f32.xlu0 %v918
        %v920 = vpop.xlane.xlu0 %919
        %v921 = vrcp.pop %v920
        %v922 = vmul.f32 %v920, %v921
        %v923 = vsub.f32 2.0, %v922
        %v924 = vmul.f32 %v921, %v923
        %v925 = vmul.f32 %v917, %v924
        %v926 = vpack.c.bf16 %v925, %v925
        %v928 = vsel %vm865, %v926, 0
        %vm930 = vcmask 1043456
        %v932 = vsel %vm930, %v864, 0
        %934 = vmatprep.subr.bf16.mxu0 0
        %935 = vmatpush1.bf16.msra.mxu0 %v932
        %936 = vmatprep.subr.bf16.mxu0 0
        %937 = vmatpush1.bf16.msra.mxu0 0
        %938 = vmatprep.subr.bf16.mxu0 0
        %939 = vmatpush1.bf16.msra.mxu0 0
        %940 = vmatprep.subr.bf16.mxu0 0
        %941 = vmatpush1.bf16.msra.mxu0 0
        %942 = vmatprep.subr.bf16.mxu0 0
        %943 = vmatpush1.bf16.msra.mxu0 0
        %944 = vmatprep.subr.bf16.mxu0 0
        %945 = vmatpush1.bf16.msra.mxu0 0
        %946 = vmatprep.subr.bf16.mxu0 0
        %947 = vmatpush1.bf16.msra.mxu0 0
        %948 = vmatprep.subr.bf16.mxu0 0
        %949 = vmatpush1.bf16.msra.mxu0 0
        %950 = vmatprep.subr.bf16.mxu0 0
        %951 = vmatpush1.bf16.msra.mxu0 0
        %952 = vmatprep.subr.bf16.mxu0 0
        %953 = vmatpush1.bf16.msra.mxu0 0
        %954 = vmatprep.subr.bf16.mxu0 0
        %955 = vmatpush1.bf16.msra.mxu0 0
        %956 = vmatprep.subr.bf16.mxu0 0
        %957 = vmatpush1.bf16.msra.mxu0 0
        %958 = vmatprep.subr.bf16.mxu0 0
        %959 = vmatpush1.bf16.msra.mxu0 0
        %960 = vmatprep.subr.bf16.mxu0 0
        %961 = vmatpush1.bf16.msra.mxu0 0
        %962 = vmatprep.subr.bf16.mxu0 0
        %963 = vmatpush1.bf16.msra.mxu0 0
        %964 = vmatprep.subr.bf16.mxu0 0
        %965 = vmatpush1.bf16.msra.mxu0 0
        %966 = vmatprep.mubr.bf16.mxu0 0
        %967 = vmatmul.mubr.bf16.gmra.mrb[0].mxu0 %v928
        %v968 = vpop.f32.mrb[0].mxu0
        %v969 = vadd.f32 0.0, %v968
        %v970 = vpop.f32.mrb[0].mxu0
        %v971 = vpop.f32.mrb[0].mxu0
        %v972 = vpop.f32.mrb[0].mxu0
        %973 = vdwg.mxu0
        %v974 = vpack.c.bf16 %v969, %v969
        %vm975 = vcmask 60416
        %976 = vst.msk [vmem:[#allocation4] sm:$0xf] %vm975, %v974
        %v977 = vld [vmem:[#allocation2] sm:$0xf]
        %v978 = vld [vmem:[#allocation3] sm:$0xf]
        %980 = vrot.lane.b32.xlu0 %v848, 120
        %v981 = vpop.permute.xlu0 %980
        %v983 = vunpack.c.l.b16 %v977
        %v984 = vpack.c.b16 %v983, %v983
        %985 = vrot.lane.b32.xlu0 %v984, 120
        %v986 = vpop.permute.xlu0 %985
        %v988 = vsel %vm865, %v981, 0
        %v991 = vsel %vm865, %v986, 0
        %993 = vmatprep.subr.bf16.mxu0 0
        %994 = vmatpush1.bf16.xpose.msra.mxu0 %v991
        %995 = vmatprep.subr.bf16.mxu0 0
        %996 = vmatpush1.bf16.xpose.msra.mxu0 0
        %997 = vmatprep.subr.bf16.mxu0 0
        %998 = vmatpush1.bf16.xpose.msra.mxu0 0
        %999 = vmatprep.subr.bf16.mxu0 0
        %1000 = vmatpush1.bf16.xpose.msra.mxu0 0
        %1001 = vmatprep.subr.bf16.mxu0 0
        %1002 = vmatpush1.bf16.xpose.msra.mxu0 0
        %1003 = vmatprep.subr.bf16.mxu0 0
        %1004 = vmatpush1.bf16.xpose.msra.mxu0 0
        %1005 = vmatprep.subr.bf16.mxu0 0
        %1006 = vmatpush1.bf16.xpose.msra.mxu0 0
        %1007 = vmatprep.subr.bf16.mxu0 0
        %1008 = vmatpush1.bf16.xpose.msra.mxu0 0
        %1009 = vmatprep.subr.bf16.mxu0 0
        %1010 = vmatpush1.bf16.xpose.msra.mxu0 0
        %1011 = vmatprep.subr.bf16.mxu0 0
        %1012 = vmatpush1.bf16.xpose.msra.mxu0 0
        %1013 = vmatprep.subr.bf16.mxu0 0
        %1014 = vmatpush1.bf16.xpose.msra.mxu0 0
        %1015 = vmatprep.subr.bf16.mxu0 0
        %1016 = vmatpush1.bf16.xpose.msra.mxu0 0
        %1017 = vmatprep.subr.bf16.mxu0 0
        %1018 = vmatpush1.bf16.xpose.msra.mxu0 0
        %1019 = vmatprep.subr.bf16.mxu0 0
        %1020 = vmatpush1.bf16.xpose.msra.mxu0 0
        %1021 = vmatprep.subr.bf16.mxu0 0
        %1022 = vmatpush1.bf16.xpose.msra.mxu0 0
        %1023 = vmatprep.subr.bf16.mxu0 0
        %1024 = vmatpush1.bf16.xpose.msra.mxu0 0
        %1025 = vmatprep.mubr.bf16.mxu0 0
        %1026 = vmatmul.mubr.bf16.gmra.mrb[0].mxu0 %v988
        %v1027 = vpop.f32.mrb[0].mxu0
        %v1028 = vadd.f32 %v862, %v1027
        %v1029 = vpop.f32.mrb[0].mxu0
        %v1030 = vpop.f32.mrb[0].mxu0
        %v1031 = vpop.f32.mrb[0].mxu0
        %1032 = vdwg.mxu0
        %v1033 = vsel %vm865, %v1028, -inf
        %1034 = vmax.xlane.f32.xlu0 %v1033
        %v1035 = vpop.xlane.xlu0 %1034
        %v1036 = vsub.f32 %v1028, %v1035
        %v1037 = vmul.f32 %v1036, 1.442695
        %v1038 = vpow.pop %v1037
        %v1039 = vsel %vm865, %v1038, 0.0
        %1040 = vadd.xlane.f32.xlu0 %v1039
        %v1041 = vpop.xlane.xlu0 %1040
        %v1042 = vrcp.pop %v1041
        %v1043 = vmul.f32 %v1041, %v1042
        %v1044 = vsub.f32 2.0, %v1043
        %v1045 = vmul.f32 %v1042, %v1044
        %v1046 = vmul.f32 %v1038, %v1045
        %v1047 = vpack.c.bf16 %v1046, %v1046
        %v1049 = vunpack.c.l.b16 %v978
        %v1050 = vpack.c.b16 %v1049, %v1049
        %1051 = vrot.lane.b32.xlu0 %v1050, 120
        %v1052 = vpop.permute.xlu0 %1051
        %v1054 = vsel %vm865, %v1047, 0
        %v1057 = vsel %vm930, %v1052, 0
        %1059 = vmatprep.subr.bf16.mxu0 0
        %1060 = vmatpush1.bf16.msra.mxu0 %v1057
        %1061 = vmatprep.subr.bf16.mxu0 0
        %1062 = vmatpush1.bf16.msra.mxu0 0
        %1063 = vmatprep.subr.bf16.mxu0 0
        %1064 = vmatpush1.bf16.msra.mxu0 0
        %1065 = vmatprep.subr.bf16.mxu0 0
        %1066 = vmatpush1.bf16.msra.mxu0 0
        %1067 = vmatprep.subr.bf16.mxu0 0
        %1068 = vmatpush1.bf16.msra.mxu0 0
        %1069 = vmatprep.subr.bf16.mxu0 0
        %1070 = vmatpush1.bf16.msra.mxu0 0
        %1071 = vmatprep.subr.bf16.mxu0 0
        %1072 = vmatpush1.bf16.msra.mxu0 0
        %1073 = vmatprep.subr.bf16.mxu0 0
        %1074 = vmatpush1.bf16.msra.mxu0 0
        %1075 = vmatprep.subr.bf16.mxu0 0
        %1076 = vmatpush1.bf16.msra.mxu0 0
        %1077 = vmatprep.subr.bf16.mxu0 0
        %1078 = vmatpush1.bf16.msra.mxu0 0
        %1079 = vmatprep.subr.bf16.mxu0 0
        %1080 = vmatpush1.bf16.msra.mxu0 0
        %1081 = vmatprep.subr.bf16.mxu0 0
        %1082 = vmatpush1.bf16.msra.mxu0 0
        %1083 = vmatprep.subr.bf16.mxu0 0
        %1084 = vmatpush1.bf16.msra.mxu0 0
        %1085 = vmatprep.subr.bf16.mxu0 0
        %1086 = vmatpush1.bf16.msra.mxu0 0
        %1087 = vmatprep.subr.bf16.mxu0 0
        %1088 = vmatpush1.bf16.msra.mxu0 0
        %1089 = vmatprep.subr.bf16.mxu0 0
        %1090 = vmatpush1.bf16.msra.mxu0 0
        %1091 = vmatprep.mubr.bf16.mxu0 0
        %1092 = vmatmul.mubr.bf16.gmra.mrb[0].mxu0 %v1054
        %v1093 = vpop.f32.mrb[0].mxu0
        %v1094 = vadd.f32 0.0, %v1093
        %v1095 = vpop.f32.mrb[0].mxu0
        %v1096 = vpop.f32.mrb[0].mxu0
        %v1097 = vpop.f32.mrb[0].mxu0
        %1098 = vdwg.mxu0
        %v1099 = vpack.c.bf16 %v1094, %v1094
        %v1101 = vunpack.c.l.b16 %v1099
        %v1102 = vpack.c.b16 %v1101, %v1101
        %1103 = vrot.lane.b32.xlu0 %v1102, 8
        %v1104 = vpop.permute.xlu0 %1103
        %vm1106 = vcmask 126016
        %1107 = vst.msk [vmem:[#allocation4] sm:$0xf] %vm1106, %v1104
        %v1108 = vld [vmem:[#allocation2] sm:$0xf]
        %v1109 = vld [vmem:[#allocation3] sm:$0xf]
        %1110 = vrot.lane.b32.xlu0 %v848, 112
        %v1111 = vpop.permute.xlu0 %1110
        %v1113 = vunpack.c.l.b16 %v1108
        %v1114 = vpack.c.b16 %v1113, %v1113
        %1115 = vrot.lane.b32.xlu0 %v1114, 112
        %v1116 = vpop.permute.xlu0 %1115
        %v1118 = vsel %vm865, %v1111, 0
        %v1121 = vsel %vm865, %v1116, 0
        %1123 = vmatprep.subr.bf16.mxu0 0
        %1124 = vmatpush1.bf16.xpose.msra.mxu0 %v1121
        %1125 = vmatprep.subr.bf16.mxu0 0
        %1126 = vmatpush1.bf16.xpose.msra.mxu0 0
        %1127 = vmatprep.subr.bf16.mxu0 0
        %1128 = vmatpush1.bf16.xpose.msra.mxu0 0
        %1129 = vmatprep.subr.bf16.mxu0 0
        %1130 = vmatpush1.bf16.xpose.msra.mxu0 0
        %1131 = vmatprep.subr.bf16.mxu0 0
        %1132 = vmatpush1.bf16.xpose.msra.mxu0 0
        %1133 = vmatprep.subr.bf16.mxu0 0
        %1134 = vmatpush1.bf16.xpose.msra.mxu0 0
        %1135 = vmatprep.subr.bf16.mxu0 0
        %1136 = vmatpush1.bf16.xpose.msra.mxu0 0
        %1137 = vmatprep.subr.bf16.mxu0 0
        %1138 = vmatpush1.bf16.xpose.msra.mxu0 0
        %1139 = vmatprep.subr.bf16.mxu0 0
        %1140 = vmatpush1.bf16.xpose.msra.mxu0 0
        %1141 = vmatprep.subr.bf16.mxu0 0
        %1142 = vmatpush1.bf16.xpose.msra.mxu0 0
        %1143 = vmatprep.subr.bf16.mxu0 0
        %1144 = vmatpush1.bf16.xpose.msra.mxu0 0
        %1145 = vmatprep.subr.bf16.mxu0 0
        %1146 = vmatpush1.bf16.xpose.msra.mxu0 0
        %1147 = vmatprep.subr.bf16.mxu0 0
        %1148 = vmatpush1.bf16.xpose.msra.mxu0 0
        %1149 = vmatprep.subr.bf16.mxu0 0
        %1150 = vmatpush1.bf16.xpose.msra.mxu0 0
        %1151 = vmatprep.subr.bf16.mxu0 0
        %1152 = vmatpush1.bf16.xpose.msra.mxu0 0
        %1153 = vmatprep.subr.bf16.mxu0 0
        %1154 = vmatpush1.bf16.xpose.msra.mxu0 0
        %1155 = vmatprep.mubr.bf16.mxu0 0
        %1156 = vmatmul.mubr.bf16.gmra.mrb[0].mxu0 %v1118
        %v1157 = vpop.f32.mrb[0].mxu0
        %v1158 = vadd.f32 %v862, %v1157
        %v1159 = vpop.f32.mrb[0].mxu0
        %v1160 = vpop.f32.mrb[0].mxu0
        %v1161 = vpop.f32.mrb[0].mxu0
        %1162 = vdwg.mxu0
        %v1163 = vsel %vm865, %v1158, -inf
        %1164 = vmax.xlane.f32.xlu0 %v1163
        %v1165 = vpop.xlane.xlu0 %1164
        %v1166 = vsub.f32 %v1158, %v1165
        %v1167 = vmul.f32 %v1166, 1.442695
        %v1168 = vpow.pop %v1167
        %v1169 = vsel %vm865, %v1168, 0.0
        %1170 = vadd.xlane.f32.xlu0 %v1169
        %v1171 = vpop.xlane.xlu0 %1170
        %v1172 = vrcp.pop %v1171
        %v1173 = vmul.f32 %v1171, %v1172
        %v1174 = vsub.f32 2.0, %v1173
        %v1175 = vmul.f32 %v1172, %v1174
        %v1176 = vmul.f32 %v1168, %v1175
        %v1177 = vpack.c.bf16 %v1176, %v1176
        %v1179 = vunpack.c.l.b16 %v1109
        %v1180 = vpack.c.b16 %v1179, %v1179
        %1181 = vrot.lane.b32.xlu0 %v1180, 112
        %v1182 = vpop.permute.xlu0 %1181
        %v1184 = vsel %vm865, %v1177, 0
        %v1187 = vsel %vm930, %v1182, 0
        %1189 = vmatprep.subr.bf16.mxu0 0
        %1190 = vmatpush1.bf16.msra.mxu0 %v1187
        %1191 = vmatprep.subr.bf16.mxu0 0
        %1192 = vmatpush1.bf16.msra.mxu0 0
        %1193 = vmatprep.subr.bf16.mxu0 0
        %1194 = vmatpush1.bf16.msra.mxu0 0
        %1195 = vmatprep.subr.bf16.mxu0 0
        %1196 = vmatpush1.bf16.msra.mxu0 0
        %1197 = vmatprep.subr.bf16.mxu0 0
        %1198 = vmatpush1.bf16.msra.mxu0 0
        %1199 = vmatprep.subr.bf16.mxu0 0
        %1200 = vmatpush1.bf16.msra.mxu0 0
        %1201 = vmatprep.subr.bf16.mxu0 0
        %1202 = vmatpush1.bf16.msra.mxu0 0
        %1203 = vmatprep.subr.bf16.mxu0 0
        %1204 = vmatpush1.bf16.msra.mxu0 0
        %1205 = vmatprep.subr.bf16.mxu0 0
        %1206 = vmatpush1.bf16.msra.mxu0 0
        %1207 = vmatprep.subr.bf16.mxu0 0
        %1208 = vmatpush1.bf16.msra.mxu0 0
        %1209 = vmatprep.subr.bf16.mxu0 0
        %1210 = vmatpush1.bf16.msra.mxu0 0
        %1211 = vmatprep.subr.bf16.mxu0 0
        %1212 = vmatpush1.bf16.msra.mxu0 0
        %1213 = vmatprep.subr.bf16.mxu0 0
        %1214 = vmatpush1.bf16.msra.mxu0 0
        %1215 = vmatprep.subr.bf16.mxu0 0
        %1216 = vmatpush1.bf16.msra.mxu0 0
        %1217 = vmatprep.subr.bf16.mxu0 0
        %1218 = vmatpush1.bf16.msra.mxu0 0
        %1219 = vmatprep.subr.bf16.mxu0 0
        %1220 = vmatpush1.bf16.msra.mxu0 0
        %1221 = vmatprep.mubr.bf16.mxu0 0
        %1222 = vmatmul.mubr.bf16.gmra.mrb[0].mxu0 %v1184
        %v1223 = vpop.f32.mrb[0].mxu0
        %v1224 = vadd.f32 0.0, %v1223
        %v1225 = vpop.f32.mrb[0].mxu0
        %v1226 = vpop.f32.mrb[0].mxu0
        %v1227 = vpop.f32.mrb[0].mxu0
        %1228 = vdwg.mxu0
        %v1229 = vpack.c.bf16 %v1224, %v1224
        %v1231 = vunpack.c.l.b16 %v1229
        %v1232 = vpack.c.b16 %v1231, %v1231
        %1233 = vrot.lane.b32.xlu0 %v1232, 16
        %v1234 = vpop.permute.xlu0 %1233
        %vm1236 = vcmask 191616
        %1237 = vst.msk [vmem:[#allocation4] sm:$0xf] %vm1236, %v1234
        %v1238 = vld [vmem:[#allocation2] sm:$0xf]
        %v1239 = vld [vmem:[#allocation3] sm:$0xf]
        %1240 = vrot.lane.b32.xlu0 %v848, 104
        %v1241 = vpop.permute.xlu0 %1240
        %v1243 = vunpack.c.l.b16 %v1238
        %v1244 = vpack.c.b16 %v1243, %v1243
        %1245 = vrot.lane.b32.xlu0 %v1244, 104
        %v1246 = vpop.permute.xlu0 %1245
        %v1248 = vsel %vm865, %v1241, 0
        %v1251 = vsel %vm865, %v1246, 0
        %1253 = vmatprep.subr.bf16.mxu0 0
        %1254 = vmatpush1.bf16.xpose.msra.mxu0 %v1251
        %1255 = vmatprep.subr.bf16.mxu0 0
        %1256 = vmatpush1.bf16.xpose.msra.mxu0 0
        %1257 = vmatprep.subr.bf16.mxu0 0
        %1258 = vmatpush1.bf16.xpose.msra.mxu0 0
        %1259 = vmatprep.subr.bf16.mxu0 0
        %1260 = vmatpush1.bf16.xpose.msra.mxu0 0
        %1261 = vmatprep.subr.bf16.mxu0 0
        %1262 = vmatpush1.bf16.xpose.msra.mxu0 0
        %1263 = vmatprep.subr.bf16.mxu0 0
        %1264 = vmatpush1.bf16.xpose.msra.mxu0 0
        %1265 = vmatprep.subr.bf16.mxu0 0
        %1266 = vmatpush1.bf16.xpose.msra.mxu0 0
        %1267 = vmatprep.subr.bf16.mxu0 0
        %1268 = vmatpush1.bf16.xpose.msra.mxu0 0
        %1269 = vmatprep.subr.bf16.mxu0 0
        %1270 = vmatpush1.bf16.xpose.msra.mxu0 0
        %1271 = vmatprep.subr.bf16.mxu0 0
        %1272 = vmatpush1.bf16.xpose.msra.mxu0 0
        %1273 = vmatprep.subr.bf16.mxu0 0
        %1274 = vmatpush1.bf16.xpose.msra.mxu0 0
        %1275 = vmatprep.subr.bf16.mxu0 0
        %1276 = vmatpush1.bf16.xpose.msra.mxu0 0
        %1277 = vmatprep.subr.bf16.mxu0 0
        %1278 = vmatpush1.bf16.xpose.msra.mxu0 0
        %1279 = vmatprep.subr.bf16.mxu0 0
        %1280 = vmatpush1.bf16.xpose.msra.mxu0 0
        %1281 = vmatprep.subr.bf16.mxu0 0
        %1282 = vmatpush1.bf16.xpose.msra.mxu0 0
        %1283 = vmatprep.subr.bf16.mxu0 0
        %1284 = vmatpush1.bf16.xpose.msra.mxu0 0
        %1285 = vmatprep.mubr.bf16.mxu0 0
        %1286 = vmatmul.mubr.bf16.gmra.mrb[0].mxu0 %v1248
        %v1287 = vpop.f32.mrb[0].mxu0
        %v1288 = vadd.f32 %v862, %v1287
        %v1289 = vpop.f32.mrb[0].mxu0
        %v1290 = vpop.f32.mrb[0].mxu0
        %v1291 = vpop.f32.mrb[0].mxu0
        %1292 = vdwg.mxu0
        %v1293 = vsel %vm865, %v1288, -inf
        %1294 = vmax.xlane.f32.xlu0 %v1293
        %v1295 = vpop.xlane.xlu0 %1294
        %v1296 = vsub.f32 %v1288, %v1295
        %v1297 = vmul.f32 %v1296, 1.442695
        %v1298 = vpow.pop %v1297
        %v1299 = vsel %vm865, %v1298, 0.0
        %1300 = vadd.xlane.f32.xlu0 %v1299
        %v1301 = vpop.xlane.xlu0 %1300
        %v1302 = vrcp.pop %v1301
        %v1303 = vmul.f32 %v1301, %v1302
        %v1304 = vsub.f32 2.0, %v1303
        %v1305 = vmul.f32 %v1302, %v1304
        %v1306 = vmul.f32 %v1298, %v1305
        %v1307 = vpack.c.bf16 %v1306, %v1306
        %v1309 = vunpack.c.l.b16 %v1239
        %v1310 = vpack.c.b16 %v1309, %v1309
        %1311 = vrot.lane.b32.xlu0 %v1310, 104
        %v1312 = vpop.permute.xlu0 %1311
        %v1314 = vsel %vm865, %v1307, 0
        %v1317 = vsel %vm930, %v1312, 0
        %1319 = vmatprep.subr.bf16.mxu0 0
        %1320 = vmatpush1.bf16.msra.mxu0 %v1317
        %1321 = vmatprep.subr.bf16.mxu0 0
        %1322 = vmatpush1.bf16.msra.mxu0 0
        %1323 = vmatprep.subr.bf16.mxu0 0
        %1324 = vmatpush1.bf16.msra.mxu0 0
        %1325 = vmatprep.subr.bf16.mxu0 0
        %1326 = vmatpush1.bf16.msra.mxu0 0
        %1327 = vmatprep.subr.bf16.mxu0 0
        %1328 = vmatpush1.bf16.msra.mxu0 0
        %1329 = vmatprep.subr.bf16.mxu0 0
        %1330 = vmatpush1.bf16.msra.mxu0 0
        %1331 = vmatprep.subr.bf16.mxu0 0
        %1332 = vmatpush1.bf16.msra.mxu0 0
        %1333 = vmatprep.subr.bf16.mxu0 0
        %1334 = vmatpush1.bf16.msra.mxu0 0
        %1335 = vmatprep.subr.bf16.mxu0 0
        %1336 = vmatpush1.bf16.msra.mxu0 0
        %1337 = vmatprep.subr.bf16.mxu0 0
        %1338 = vmatpush1.bf16.msra.mxu0 0
        %1339 = vmatprep.subr.bf16.mxu0 0
        %1340 = vmatpush1.bf16.msra.mxu0 0
        %1341 = vmatprep.subr.bf16.mxu0 0
        %1342 = vmatpush1.bf16.msra.mxu0 0
        %1343 = vmatprep.subr.bf16.mxu0 0
        %1344 = vmatpush1.bf16.msra.mxu0 0
        %1345 = vmatprep.subr.bf16.mxu0 0
        %1346 = vmatpush1.bf16.msra.mxu0 0
        %1347 = vmatprep.subr.bf16.mxu0 0
        %1348 = vmatpush1.bf16.msra.mxu0 0
        %1349 = vmatprep.subr.bf16.mxu0 0
        %1350 = vmatpush1.bf16.msra.mxu0 0
        %1351 = vmatprep.mubr.bf16.mxu0 0
        %1352 = vmatmul.mubr.bf16.gmra.mrb[0].mxu0 %v1314
        %v1353 = vpop.f32.mrb[0].mxu0
        %v1354 = vadd.f32 0.0, %v1353
        %v1355 = vpop.f32.mrb[0].mxu0
        %v1356 = vpop.f32.mrb[0].mxu0
        %v1357 = vpop.f32.mrb[0].mxu0
        %1358 = vdwg.mxu0
        %v1359 = vpack.c.bf16 %v1354, %v1354
        %v1361 = vunpack.c.l.b16 %v1359
        %v1362 = vpack.c.b16 %v1361, %v1361
        %1363 = vrot.lane.b32.xlu0 %v1362, 24
        %v1364 = vpop.permute.xlu0 %1363
        %vm1366 = vcmask 257216
        %1367 = vst.msk [vmem:[#allocation4] sm:$0xf] %vm1366, %v1364
        %v1368 = vld [vmem:[#allocation4] sm:$0xf]
        %v1369 = vld [vmem:[#allocation11] sm:$0xf]
        %v1370 = vld [vmem:[#allocation11 + $0x4] sm:$0xf]
        %v1371 = vld [vmem:[#allocation11 + $0x8] sm:$0xf]
        %v1372 = vld [vmem:[#allocation11 + $0xc] sm:$0xf]
        %v1377 = vunpack.c.l.b16 %v1369
        %v1378 = vunpack.c.l.b16 %v1370
        %v1379 = vunpack.c.l.b16 %v1371
        %v1380 = vunpack.c.l.b16 %v1372
        %v1381 = vpack.c.b16 %v1378, %v1377
        %v1382 = vpack.c.b16 %v1380, %v1379
        %v1386 = vsel %vm797, %v1368, 0
        %1388 = vmatprep.subr.bf16.mxu0 0
        %1389 = vmatpush1.bf16.msra.mxu0 %v1381
        %1390 = vmatprep.subr.bf16.mxu0 0
        %1391 = vmatpush1.bf16.msra.mxu0 %v1382
        %1392 = vmatprep.subr.bf16.mxu0 0
        %1393 = vmatpush1.bf16.msra.mxu0 0
        %1394 = vmatprep.subr.bf16.mxu0 0
        %1395 = vmatpush1.bf16.msra.mxu0 0
        %1396 = vmatprep.subr.bf16.mxu0 0
        %1397 = vmatpush1.bf16.msra.mxu0 0
        %1398 = vmatprep.subr.bf16.mxu0 0
        %1399 = vmatpush1.bf16.msra.mxu0 0
        %1400 = vmatprep.subr.bf16.mxu0 0
        %1401 = vmatpush1.bf16.msra.mxu0 0
        %1402 = vmatprep.subr.bf16.mxu0 0
        %1403 = vmatpush1.bf16.msra.mxu0 0
        %1404 = vmatprep.subr.bf16.mxu0 0
        %1405 = vmatpush1.bf16.msra.mxu0 0
        %1406 = vmatprep.subr.bf16.mxu0 0
        %1407 = vmatpush1.bf16.msra.mxu0 0
        %1408 = vmatprep.subr.bf16.mxu0 0
        %1409 = vmatpush1.bf16.msra.mxu0 0
        %1410 = vmatprep.subr.bf16.mxu0 0
        %1411 = vmatpush1.bf16.msra.mxu0 0
        %1412 = vmatprep.subr.bf16.mxu0 0
        %1413 = vmatpush1.bf16.msra.mxu0 0
        %1414 = vmatprep.subr.bf16.mxu0 0
        %1415 = vmatpush1.bf16.msra.mxu0 0
        %1416 = vmatprep.subr.bf16.mxu0 0
        %1417 = vmatpush1.bf16.msra.mxu0 0
        %1418 = vmatprep.subr.bf16.mxu0 0
        %1419 = vmatpush1.bf16.msra.mxu0 0
        %1420 = vmatprep.mubr.bf16.mxu0 0
        %1421 = vmatmul.mubr.bf16.gmra.mrb[0].mxu0 %v1386
        %v1422 = vpop.f32.mrb[0].mxu0
        %v1423 = vadd.f32 0.0, %v1422
        %v1424 = vpop.f32.mrb[0].mxu0
        %v1425 = vpop.f32.mrb[0].mxu0
        %v1426 = vpop.f32.mrb[0].mxu0
        %1427 = vdwg.mxu0
        %v1428 = vmul.f32 %v1423, %v852
        %v1429 = vadd.f32 %v777, %v1428
        %v1430 = vld [vmem:[#allocation13] sm:$0x1]
        %v1431 = vld [vmem:[#allocation14] sm:$0x1]
        %v1432 = vsel %vm797, %v1429, 0.0
        %1433 = vadd.xlane.f32.xlu0 %v1432
        %v1434 = vpop.xlane.xlu0 %1433
        %v1435 = vrcp.pop 32.0
        %v1436 = vmul.f32 %v1434, %v1435
        %v1437 = vsub.f32 %v1429, %v1436
        %v1438 = vmul.f32 %v1437, %v1437
        %v1439 = vsel %vm797, %v1438, 0.0
        %1440 = vadd.xlane.f32.xlu0 %v1439
        %v1441 = vpop.xlane.xlu0 %1440
        %v1442 = vmul.f32 %v1441, %v1435
        %v1443 = vadd.f32 %v1442, 1e-05
        %v1444 = vrsqrt.pop %v1443
        %v1445 = vmul.f32 %v1437, %v1444
        %v1447 = vlaneseq
        %v1448 = vshrl.u32 %v1447, 7
        %v1449 = vsub.s32 0, %v1448
        %v1450 = vrot.slane %v1430, %v1449
        %v1452 = vmul.f32 %v1445, %v1450
        %v1454 = vlaneseq
        %v1455 = vshrl.u32 %v1454, 7
        %v1456 = vsub.s32 0, %v1455
        %v1457 = vrot.slane %v1431, %v1456
        %v1459 = vadd.f32 %v1452, %v1457
        %v1460 = vmul.f32 %v1459, %v852
        %v1461 = vpack.c.bf16 %v1460, %v1460
        %v1462 = vld [vmem:[%s9] sm:$0xf]
        %v1463 = vld [vmem:[%s9 + $0x4] sm:$0xf]
        %v1464 = vld [vmem:[%s9 + $0x8] sm:$0xf]
        %v1465 = vld [vmem:[%s9 + $0xc] sm:$0xf]
        %v1466 = vld [vmem:[%s10] sm:$0x1]
        %v1468 = vlaneseq
        %v1469 = vshrl.u32 %v1468, 7
        %v1470 = vsub.s32 0, %v1469
        %v1471 = vrot.slane %v1466, %v1470
        %v1477 = vunpack.c.l.b16 %v1462
        %v1478 = vunpack.c.l.b16 %v1463
        %v1479 = vunpack.c.l.b16 %v1464
        %v1480 = vunpack.c.l.b16 %v1465
        %v1481 = vpack.c.b16 %v1478, %v1477
        %v1482 = vpack.c.b16 %v1480, %v1479
        %v1486 = vsel %vm797, %v1461, 0
        %1488 = vmatprep.subr.bf16.mxu0 0
        %1489 = vmatpush1.bf16.msra.mxu0 %v1481
        %1490 = vmatprep.subr.bf16.mxu0 0
        %1491 = vmatpush1.bf16.msra.mxu0 %v1482
        %1492 = vmatprep.subr.bf16.mxu0 0
        %1493 = vmatpush1.bf16.msra.mxu0 0
        %1494 = vmatprep.subr.bf16.mxu0 0
        %1495 = vmatpush1.bf16.msra.mxu0 0
        %1496 = vmatprep.subr.bf16.mxu0 0
        %1497 = vmatpush1.bf16.msra.mxu0 0
        %1498 = vmatprep.subr.bf16.mxu0 0
        %1499 = vmatpush1.bf16.msra.mxu0 0
        %1500 = vmatprep.subr.bf16.mxu0 0
        %1501 = vmatpush1.bf16.msra.mxu0 0
        %1502 = vmatprep.subr.bf16.mxu0 0
        %1503 = vmatpush1.bf16.msra.mxu0 0
        %1504 = vmatprep.subr.bf16.mxu0 0
        %1505 = vmatpush1.bf16.msra.mxu0 0
        %1506 = vmatprep.subr.bf16.mxu0 0
        %1507 = vmatpush1.bf16.msra.mxu0 0
        %1508 = vmatprep.subr.bf16.mxu0 0
        %1509 = vmatpush1.bf16.msra.mxu0 0
        %1510 = vmatprep.subr.bf16.mxu0 0
        %1511 = vmatpush1.bf16.msra.mxu0 0
        %1512 = vmatprep.subr.bf16.mxu0 0
        %1513 = vmatpush1.bf16.msra.mxu0 0
        %1514 = vmatprep.subr.bf16.mxu0 0
        %1515 = vmatpush1.bf16.msra.mxu0 0
        %1516 = vmatprep.subr.bf16.mxu0 0
        %1517 = vmatpush1.bf16.msra.mxu0 0
        %1518 = vmatprep.subr.bf16.mxu0 0
        %1519 = vmatpush1.bf16.msra.mxu0 0
        %1520 = vmatprep.mubr.bf16.mxu0 0
        %1521 = vmatmul.mubr.bf16.gmra.mrb[0].mxu0 %v1486
        %v1522 = vpop.f32.mrb[0].mxu0
        %v1523 = vadd.f32 %v1471, %v1522
        %v1524 = vpop.f32.mrb[0].mxu0
        %v1525 = vpop.f32.mrb[0].mxu0
        %v1526 = vpop.f32.mrb[0].mxu0
        %1527 = vdwg.mxu0
        %v1528 = vmax.f32 %v1523, 0.0
        %v1529 = vpack.c.bf16 %v1528, %v1528
        %v1530 = vld [vmem:[#allocation16] sm:$0xf]
        %v1531 = vld [vmem:[#allocation16 + $0x4] sm:$0xf]
        %v1532 = vld [vmem:[#allocation16 + $0x8] sm:$0xf]
        %v1533 = vld [vmem:[#allocation16 + $0xc] sm:$0xf]
        %v1534 = vld [vmem:[%s12] sm:$0x1]
        %v1536 = vlaneseq
        %v1537 = vshrl.u32 %v1536, 7
        %v1538 = vsub.s32 0, %v1537
        %v1539 = vrot.slane %v1534, %v1538
        %v1545 = vunpack.c.l.b16 %v1530
        %v1546 = vunpack.c.l.b16 %v1531
        %v1547 = vunpack.c.l.b16 %v1532
        %v1548 = vunpack.c.l.b16 %v1533
        %v1549 = vpack.c.b16 %v1546, %v1545
        %v1550 = vpack.c.b16 %v1548, %v1547
        %v1554 = vsel %vm797, %v1529, 0
        %1556 = vmatprep.subr.bf16.mxu0 0
        %1557 = vmatpush1.bf16.msra.mxu0 %v1549
        %1558 = vmatprep.subr.bf16.mxu0 0
        %1559 = vmatpush1.bf16.msra.mxu0 %v1550
        %1560 = vmatprep.subr.bf16.mxu0 0
        %1561 = vmatpush1.bf16.msra.mxu0 0
        %1562 = vmatprep.subr.bf16.mxu0 0
        %1563 = vmatpush1.bf16.msra.mxu0 0
        %1564 = vmatprep.subr.bf16.mxu0 0
        %1565 = vmatpush1.bf16.msra.mxu0 0
        %1566 = vmatprep.subr.bf16.mxu0 0
        %1567 = vmatpush1.bf16.msra.mxu0 0
        %1568 = vmatprep.subr.bf16.mxu0 0
        %1569 = vmatpush1.bf16.msra.mxu0 0
        %1570 = vmatprep.subr.bf16.mxu0 0
        %1571 = vmatpush1.bf16.msra.mxu0 0
        %1572 = vmatprep.subr.bf16.mxu0 0
        %1573 = vmatpush1.bf16.msra.mxu0 0
        %1574 = vmatprep.subr.bf16.mxu0 0
        %1575 = vmatpush1.bf16.msra.mxu0 0
        %1576 = vmatprep.subr.bf16.mxu0 0
        %1577 = vmatpush1.bf16.msra.mxu0 0
        %1578 = vmatprep.subr.bf16.mxu0 0
        %1579 = vmatpush1.bf16.msra.mxu0 0
        %1580 = vmatprep.subr.bf16.mxu0 0
        %1581 = vmatpush1.bf16.msra.mxu0 0
        %1582 = vmatprep.subr.bf16.mxu0 0
        %1583 = vmatpush1.bf16.msra.mxu0 0
        %1584 = vmatprep.subr.bf16.mxu0 0
        %1585 = vmatpush1.bf16.msra.mxu0 0
        %1586 = vmatprep.subr.bf16.mxu0 0
        %1587 = vmatpush1.bf16.msra.mxu0 0
        %1588 = vmatprep.mubr.bf16.mxu0 0
        %1589 = vmatmul.mubr.bf16.gmra.mrb[0].mxu0 %v1554
        %v1590 = vpop.f32.mrb[0].mxu0
        %v1591 = vadd.f32 %v1539, %v1590
        %v1592 = vpop.f32.mrb[0].mxu0
        %v1593 = vpop.f32.mrb[0].mxu0
        %v1594 = vpop.f32.mrb[0].mxu0
        %1595 = vdwg.mxu0
        %v1596 = vmul.f32 %v1591, %v852
        %v1597 = vadd.f32 %v1460, %v1596
        %v1598 = vld [vmem:[%s13] sm:$0x1]
        %v1599 = vld [vmem:[%s14] sm:$0x1]
        %v1600 = vsel %vm797, %v1597, 0.0
        %1601 = vadd.xlane.f32.xlu0 %v1600
        %v1602 = vpop.xlane.xlu0 %1601
        %v1603 = vmul.f32 %v1602, %v1435
        %v1604 = vsub.f32 %v1597, %v1603
        %v1605 = vmul.f32 %v1604, %v1604
        %v1606 = vsel %vm797, %v1605, 0.0
        %1607 = vadd.xlane.f32.xlu0 %v1606
        %v1608 = vpop.xlane.xlu0 %1607
        %v1609 = vmul.f32 %v1608, %v1435
        %v1610 = vadd.f32 %v1609, 1e-05
        %v1611 = vrsqrt.pop %v1610
        %v1612 = vmul.f32 %v1604, %v1611
        %v1614 = vlaneseq
        %v1615 = vshrl.u32 %v1614, 7
        %v1616 = vsub.s32 0, %v1615
        %v1617 = vrot.slane %v1598, %v1616
        %v1619 = vmul.f32 %v1612, %v1617
        %v1621 = vlaneseq
        %v1622 = vshrl.u32 %v1621, 7
        %v1623 = vsub.s32 0, %v1622
        %v1624 = vrot.slane %v1599, %v1623
        %v1626 = vadd.f32 %v1619, %v1624
        %v1627 = vmul.f32 %v1626, %v852
        %1628 = vst.msk [vmem:[%s629] sm:$0xff] %vm797, %v1627
        %s1629 = sand.u32 %s387, 1
        %s1630 = scalar_lea.sflag [#allocation7], %s1629
        %s1631 = sand.u32 %s387, 1
        %s1632 = smul.addr %s1631, 8
        %s1633 = scalar_lea.vmem [#allocation17], %s1632
        // Predicated region
        $region113: #{tpu_custom_call.1} parent=79 // pred_check
          %p1634 = pneg %p397
        $region114: #{tpu_custom_call.1} parent=79 // pred_check_branch
          %1636 = sbr.rel (%p1634) target = $region116
        $region115: #{tpu_custom_call.1} parent=79 // pred_region
          %s1638 = ssub.s32 128, 128
          %1639 = vsyncadd %s1630, %s1638
          %s1640 = sadd.s32 %s40, %s39
          %s1641 = smul.addr %s1640, 128
          %s1642 = scalar_lea.hbm %s15, %s1641
          %s1644 = sshll.u32 %s1633, 4
          %s1645 = int_to_ptr.vmem [resolvable:$true] %s1644
          %1647 = dma.vmem_to_hbm [thread:$0]  %s1645, 128, %s1642, %s1630
        $region116: #{tpu_custom_call.1} parent=79 // pred_fallthru
          _
      $region80: #{tpu_custom_call.1} parent=5 // pred_fallthru
        _
      %p1648 = scmp.le.s32.totalorder 2, %s30
      // Predicated region
      $region117: #{tpu_custom_call.1} parent=5 // pred_check
        %p1649 = pneg %p1648
      $region118: #{tpu_custom_call.1} parent=5 // pred_check_branch
        %1651 = sbr.rel (%p1649) target = $region120
      $region119: #{tpu_custom_call.1} parent=5 // pred_region
        %s1652 = ssub.s32 %s30, 2
        // Predicated region
        $region121: #{tpu_custom_call.1} parent=119 // pred_check
          %p1653 = pneg %p403
        $region122: #{tpu_custom_call.1} parent=119 // pred_check_branch
          %1655 = sbr.rel (%p1653) target = $region124
        $region123: #{tpu_custom_call.1} parent=119 // pred_region
          %s1656 = sand.u32 %s388, 1
          %s1657 = scalar_lea.sflag [#allocation7], %s1656
          %s1658 = sand.u32 %s388, 1
          %s1659 = smul.addr %s1658, 8
          %s1660 = scalar_lea.vmem [#allocation17], %s1659
          %1661 = dma.done %s1657, 128
        $region124: #{tpu_custom_call.1} parent=119 // pred_fallthru
          _
      $region120: #{tpu_custom_call.1} parent=5 // pred_fallthru
        _
    $region6: #{tpu_custom_call.1} parent=1 // loop_footer
      %s34 = sadd.s32 1, %s30
    $region7: #{tpu_custom_call.1} parent=1 // loop_footer_branch
      %29 = sbr.rel target = $region3
    $region8: #{tpu_custom_call.1} parent=1 // loop_exit
      _
    %1662 = vsyncpa [#allocation6], 1
    %s1663 = scalar_lea.sflag [#allocation6], 1
    %1664 = vsyncpa %s1663, 1
    %1665 = vsyncpa [#allocation9], 1
    %1666 = vsyncpa [#allocation12], 1
    %1667 = vsyncpa [#allocation15], 1
    %1668 = vsyncpa [#allocation7], 1
    %s1669 = scalar_lea.sflag [#allocation7], 1
    %1670 = vsyncpa %s1669, 1

</llo_original>
